<compile_context>
chip_gen: v6e
topology: v6e:2x2x1
jax: 0.10.0
libtpu: 0.0.40
codegen_flags: <defaults>
</compile_context>

<pallas_src>
import math

import jax
import jax.numpy as jnp
from jax import lax
from jax.experimental import pallas as pl
from jax.experimental.pallas import tpu as pltpu


def _layer_norm(x, g, b, eps=1e-5):
    mu = jnp.mean(x, axis=-1, keepdims=True)
    xc = x - mu
    var = jnp.mean(xc * xc, axis=-1, keepdims=True)
    return xc * lax.rsqrt(var + eps) * g + b


def _gelu_exact(x):
    # PyTorch activation='gelu' -> exact (erf-based) GELU.
    return 0.5 * x * (1.0 + lax.erf(x * (1.0 / math.sqrt(2.0))))


def _transformer_kernel(x_ref, pe_ref,
                        wqkv_ref, bqkv_ref, wo_ref, bo_ref,
                        ln1g_ref, ln1b_ref, ln2g_ref, ln2b_ref,
                        w1_ref, b1_ref, w2_ref, b2_ref,
                        encg_ref, encb_ref,
                        wr1_ref, br1_ref, wr2_ref, br2_ref,
                        fcg_ref, fcb_ref, wf_ref, bf_ref,
                        out_ref, h_ref):
    S, D = x_ref.shape                       # per-batch token block
    H, _, three_hd = wqkv_ref.shape          # (H, D, 3*hd) per-layer, per-head QKV
    hd = three_hd // 3
    l = pl.program_id(1)
    num_layers = pl.num_programs(1)

    # layer 0: input scaling + positional encoding (dropout = identity in eval)
    @pl.when(l == 0)
    def _():
        h_ref[...] = x_ref[...] * math.sqrt(D) + pe_ref[...]

    h = h_ref[...]                            # (S, D) f32, persists across layers

    # ---------- self attention: all heads via batched dot_general ----------
    hb = jnp.broadcast_to(h.astype(jnp.bfloat16)[None], (H, S, D))
    qkv = lax.dot_general(hb, wqkv_ref[...], (((2,), (1,)), ((0,), (0,))),
                          preferred_element_type=jnp.float32) + bqkv_ref[...]
    q = qkv[:, :, 0:hd]                       # (H, S, hd); 1/sqrt(hd) folded into W_q
    k = qkv[:, :, hd:2 * hd]
    v = qkv[:, :, 2 * hd:3 * hd]

    scores = lax.dot_general(q.astype(jnp.bfloat16), k.astype(jnp.bfloat16),
                             (((2,), (2,)), ((0,), (0,))),
                             preferred_element_type=jnp.float32)      # (H, S, S)
    m = jnp.max(scores, axis=-1, keepdims=True)                       # f32 softmax
    e = jnp.exp(scores - m)
    p = e * pl.reciprocal(jnp.sum(e, axis=-1, keepdims=True), approx=True)
    ctx = lax.dot_general(p.astype(jnp.bfloat16), v.astype(jnp.bfloat16),
                          (((2,), (1,)), ((0,), (0,))),
                          preferred_element_type=jnp.float32)         # (H, S, hd)
    attn = jnp.sum(lax.dot_general(ctx.astype(jnp.bfloat16), wo_ref[...],
                                   (((2,), (1,)), ((0,), (0,))),
                                   preferred_element_type=jnp.float32),
                   axis=0) + bo_ref[...]                              # (S, D)

    h = _layer_norm(h + attn, ln1g_ref[...], ln1b_ref[...])

    # ---------- feed-forward block ----------
    ff = jnp.dot(h.astype(jnp.bfloat16), w1_ref[...],
                 preferred_element_type=jnp.float32) + b1_ref[...]
    ff = _gelu_exact(ff)
    ff = jnp.dot(ff.astype(jnp.bfloat16), w2_ref[...],
                 preferred_element_type=jnp.float32) + b2_ref[...]
    h = _layer_norm(h + ff, ln2g_ref[...], ln2b_ref[...])
    h_ref[...] = h

    # ---------- final encoder norm + FullyConnected head (last position) ----------
    @pl.when(l == num_layers - 1)
    def _():
        last = h[S - 1:S, :]                                          # (1, D)
        z0 = _layer_norm(last, encg_ref[...], encb_ref[...])
        r = jnp.dot(z0.astype(jnp.bfloat16), wr1_ref[...],
                    preferred_element_type=jnp.float32) + br1_ref[...]
        r = jnp.maximum(r, 0.0)
        r = jnp.dot(r.astype(jnp.bfloat16), wr2_ref[...],
                    preferred_element_type=jnp.float32) + br2_ref[...]
        z = _layer_norm(z0 + r, fcg_ref[...], fcb_ref[...])
        logits = jnp.dot(z.astype(jnp.bfloat16), wf_ref[...],
                         preferred_element_type=jnp.float32) + bf_ref[...]
        out_ref[...] = pl.reciprocal(1.0 + jnp.exp(-logits), approx=True)  # sigmoid


def make_positional_encoding(S, D):
    den = jnp.exp(-jnp.arange(0, D, 2, dtype=jnp.float32) * (math.log(10000.0) / D))
    pos = jnp.arange(0, S, dtype=jnp.float32)[:, None]
    pe = jnp.zeros((S, D), jnp.float32)
    pe = pe.at[:, 0::2].set(jnp.sin(pos * den))
    pe = pe.at[:, 1::2].set(jnp.cos(pos * den))
    return pe


def init_params(key, D, L, F_FF, out_dim):
    ks = jax.random.split(key, 14)

    def w(k, shape, scale=0.02):
        return scale * jax.random.normal(k, shape, jnp.float32)

    return dict(
        # per-layer transformer encoder weights (stacked over layers, PyTorch layout)
        wqkv=w(ks[0], (L, 3 * D, D)), bqkv=w(ks[1], (L, 1, 3 * D)),
        wo=w(ks[2], (L, D, D)),       bo=w(ks[3], (L, 1, D)),
        ln1g=jnp.ones((L, 1, D), jnp.float32), ln1b=jnp.zeros((L, 1, D), jnp.float32),
        ln2g=jnp.ones((L, 1, D), jnp.float32), ln2b=jnp.zeros((L, 1, D), jnp.float32),
        w1=w(ks[4], (L, F_FF, D)),    b1=w(ks[5], (L, 1, F_FF)),
        w2=w(ks[6], (L, D, F_FF)),    b2=w(ks[7], (L, 1, D)),
        # final encoder norm
        encg=jnp.ones((1, D), jnp.float32), encb=jnp.zeros((1, D), jnp.float32),
        # FullyConnected head (residual block + norm + fc_final)
        wr1=w(ks[8], (2 * D, D)),  br1=w(ks[9], (1, 2 * D)),
        wr2=w(ks[10], (D, 2 * D)), br2=w(ks[11], (1, D)),
        fcg=jnp.ones((1, D), jnp.float32), fcb=jnp.zeros((1, D), jnp.float32),
        wf=w(ks[12], (out_dim, D)), bf=w(ks[13], (1, out_dim)),
    )


def transformer_model_forward(data, params, *, nhead, num_layers):
    """data: (B, S, num_feats) f32; returns sigmoid(logits) of shape (B, out_dim)."""
    B, S, D = data.shape
    H, L = nhead, num_layers
    hd = D // H
    out_dim = params["wf"].shape[0]
    F_FF = params["w1"].shape[1]

    x = data.astype(jnp.float32)
    pe = make_positional_encoding(S, D)            # (S, D); NOT tiled per batch

    # ---- host-side (one-time) weight restructuring ----
    scale = 1.0 / math.sqrt(hd)                    # attention scale folded into W_q
    wqkv = params["wqkv"]                          # (L, 3D, D)  PyTorch (out, in)

    def heads(w):                                  # (L, D, D) -> (L, H, D, hd)
        return w.reshape(L, H, hd, D).transpose(0, 1, 3, 2)

    wqkv_h = jnp.concatenate(
        [heads(wqkv[:, 0:D]) * scale,
         heads(wqkv[:, D:2 * D]),
         heads(wqkv[:, 2 * D:3 * D])], axis=-1).astype(jnp.bfloat16)   # (L,H,D,3hd)
    bqkv = params["bqkv"].reshape(L, 3 * D)
    bqkv_h = jnp.concatenate(
        [(bqkv[:, 0:D] * scale).reshape(L, H, 1, hd),
         bqkv[:, D:2 * D].reshape(L, H, 1, hd),
         bqkv[:, 2 * D:3 * D].reshape(L, H, 1, hd)], axis=-1)          # (L,H,1,3hd) f32
    wo_h = params["wo"].transpose(0, 2, 1).reshape(L, H, hd, D).astype(jnp.bfloat16)
    w1_t = params["w1"].transpose(0, 2, 1).astype(jnp.bfloat16)        # (L, D, F)
    w2_t = params["w2"].transpose(0, 2, 1).astype(jnp.bfloat16)        # (L, F, D)
    wr1_t = params["wr1"].T.astype(jnp.bfloat16)                       # (D, 2D)
    wr2_t = params["wr2"].T.astype(jnp.bfloat16)                       # (2D, D)
    wf_t = params["wf"].T.astype(jnp.bfloat16)                         # (D, out)

    inputs = (x, pe, wqkv_h, bqkv_h, wo_h, params["bo"],
              params["ln1g"], params["ln1b"], params["ln2g"], params["ln2b"],
              w1_t, params["b1"], w2_t, params["b2"],
              params["encg"], params["encb"],
              wr1_t, params["br1"], wr2_t, params["br2"],
              params["fcg"], params["fcb"], wf_t, params["bf"])

    layer3 = lambda b, l: (l, 0, 0)        # per-layer weights, 3-D stacked
    layer4 = lambda b, l: (l, 0, 0, 0)     # per-layer weights, 4-D stacked
    fixed2 = lambda b, l: (0, 0)           # shared (head / pe) weights

    in_specs = [
        pl.BlockSpec((None, S, D), lambda b, l: (b, 0, 0)),      # x (this batch)
        pl.BlockSpec((S, D), fixed2),                            # positional enc.
        pl.BlockSpec((None, H, D, 3 * hd), layer4),              # wqkv (per layer)
        pl.BlockSpec((None, H, 1, 3 * hd), layer4),              # bqkv
        pl.BlockSpec((None, H, hd, D), layer4),                  # wo
        pl.BlockSpec((None, 1, D), layer3),                      # bo
        pl.BlockSpec((None, 1, D), layer3),                      # ln1 gamma
        pl.BlockSpec((None, 1, D), layer3),                      # ln1 beta
        pl.BlockSpec((None, 1, D), layer3),                      # ln2 gamma
        pl.BlockSpec((None, 1, D), layer3),                      # ln2 beta
        pl.BlockSpec((None, D, F_FF), layer3),                   # w1
        pl.BlockSpec((None, 1, F_FF), layer3),                   # b1
        pl.BlockSpec((None, F_FF, D), layer3),                   # w2
        pl.BlockSpec((None, 1, D), layer3),                      # b2
        pl.BlockSpec((1, D), fixed2),                            # enc norm gamma
        pl.BlockSpec((1, D), fixed2),                            # enc norm beta
        pl.BlockSpec((D, 2 * D), fixed2),                        # head wr1
        pl.BlockSpec((1, 2 * D), fixed2),                        # head br1
        pl.BlockSpec((2 * D, D), fixed2),                        # head wr2
        pl.BlockSpec((1, D), fixed2),                            # head br2
        pl.BlockSpec((1, D), fixed2),                            # head norm gamma
        pl.BlockSpec((1, D), fixed2),                            # head norm beta
        pl.BlockSpec((D, out_dim), fixed2),                      # wf
        pl.BlockSpec((1, out_dim), fixed2),                      # bf
    ]

    out = pl.pallas_call(
        _transformer_kernel,
        out_shape=jax.ShapeDtypeStruct((B, 1, out_dim), jnp.float32),
        grid_spec=pltpu.PrefetchScalarGridSpec(
            num_scalar_prefetch=0,
            grid=(B, L),
            in_specs=in_specs,
            out_specs=pl.BlockSpec((None, 1, out_dim), lambda b, l: (b, 0, 0)),
            scratch_shapes=[pltpu.VMEM((S, D), jnp.float32)]),   # running activations
        compiler_params=pltpu.CompilerParams(
            dimension_semantics=("parallel", "arbitrary"),
            vmem_limit_bytes=64 * 1024 * 1024),
    )(*inputs)
    return out.reshape(B, out_dim)


if __name__ == "__main__":
    # small shapes consistent with the module
    B = 2        # batch
    S = 8        # historic_input (sequence length)
    D = 32       # num_feats (d_model)
    H = 4        # nhead
    F_FF = 64    # dim_feedforward
    L = 2        # num_layers
    OUT = 1      # out_dim

    key = jax.random.PRNGKey(0)
    kd, kp = jax.random.split(key)
    data = jax.random.normal(kd, (B, S, D), jnp.float32)
    params = init_params(kp, D, L, F_FF, OUT)

    out = transformer_model_forward(data, params, nhead=H, num_layers=L)
    out = jax.block_until_ready(out)
    assert out.shape == (B, OUT)
    assert bool(jnp.all(jnp.isfinite(out)))
    print("KERNEL_OK")
</pallas_src>

<mosaic_0001>
module attributes {stable_mosaic.version = 11 : i64} {
  func.func @_transformer_kernel(%arg0: i32, %arg1: i32, %arg2: memref<1x8x32xf32, #tpu.memory_space<vmem>>, %arg3: memref<8x32xf32, #tpu.memory_space<vmem>>, %arg4: memref<1x4x32x24xbf16, #tpu.memory_space<vmem>>, %arg5: memref<1x4x1x24xf32, #tpu.memory_space<vmem>>, %arg6: memref<1x4x8x32xbf16, #tpu.memory_space<vmem>>, %arg7: memref<1x1x32xf32, #tpu.memory_space<vmem>>, %arg8: memref<1x1x32xf32, #tpu.memory_space<vmem>>, %arg9: memref<1x1x32xf32, #tpu.memory_space<vmem>>, %arg10: memref<1x1x32xf32, #tpu.memory_space<vmem>>, %arg11: memref<1x1x32xf32, #tpu.memory_space<vmem>>, %arg12: memref<1x32x64xbf16, #tpu.memory_space<vmem>>, %arg13: memref<1x1x64xf32, #tpu.memory_space<vmem>>, %arg14: memref<1x64x32xbf16, #tpu.memory_space<vmem>>, %arg15: memref<1x1x32xf32, #tpu.memory_space<vmem>>, %arg16: memref<1x32xf32, #tpu.memory_space<vmem>>, %arg17: memref<1x32xf32, #tpu.memory_space<vmem>>, %arg18: memref<32x64xbf16, #tpu.memory_space<vmem>>, %arg19: memref<1x64xf32, #tpu.memory_space<vmem>>, %arg20: memref<64x32xbf16, #tpu.memory_space<vmem>>, %arg21: memref<1x32xf32, #tpu.memory_space<vmem>>, %arg22: memref<1x32xf32, #tpu.memory_space<vmem>>, %arg23: memref<1x32xf32, #tpu.memory_space<vmem>>, %arg24: memref<32x1xbf16, #tpu.memory_space<vmem>>, %arg25: memref<1x1xf32, #tpu.memory_space<vmem>>, %arg26: memref<1x1x1xf32, #tpu.memory_space<vmem>>, %arg27: memref<8x32xf32, #tpu.memory_space<vmem>>) attributes {dimension_semantics = [#tpu.dimension_semantics<parallel>, #tpu.dimension_semantics<arbitrary>], iteration_bounds = array<i64: 2, 2>, scalar_prefetch = 0 : i64, scratch_operands = 1 : i64, tpu.core_type = #tpu.core_type<tc>, window_params = [{transform_indices = @transform_0, window_bounds = array<i64: 1, 8, 32>}, {pipeline_mode = #tpu.pipeline_mode<synchronous>, transform_indices = @transform_1, window_bounds = array<i64: 8, 32>}, {transform_indices = @transform_2, window_bounds = array<i64: 1, 4, 32, 24>}, {transform_indices = @transform_3, window_bounds = array<i64: 1, 4, 1, 24>}, {transform_indices = @transform_4, window_bounds = array<i64: 1, 4, 8, 32>}, {transform_indices = @transform_5, window_bounds = array<i64: 1, 1, 32>}, {transform_indices = @transform_6, window_bounds = array<i64: 1, 1, 32>}, {transform_indices = @transform_7, window_bounds = array<i64: 1, 1, 32>}, {transform_indices = @transform_8, window_bounds = array<i64: 1, 1, 32>}, {transform_indices = @transform_9, window_bounds = array<i64: 1, 1, 32>}, {transform_indices = @transform_10, window_bounds = array<i64: 1, 32, 64>}, {transform_indices = @transform_11, window_bounds = array<i64: 1, 1, 64>}, {transform_indices = @transform_12, window_bounds = array<i64: 1, 64, 32>}, {transform_indices = @transform_13, window_bounds = array<i64: 1, 1, 32>}, {pipeline_mode = #tpu.pipeline_mode<synchronous>, transform_indices = @transform_14, window_bounds = array<i64: 1, 32>}, {pipeline_mode = #tpu.pipeline_mode<synchronous>, transform_indices = @transform_15, window_bounds = array<i64: 1, 32>}, {pipeline_mode = #tpu.pipeline_mode<synchronous>, transform_indices = @transform_16, window_bounds = array<i64: 32, 64>}, {pipeline_mode = #tpu.pipeline_mode<synchronous>, transform_indices = @transform_17, window_bounds = array<i64: 1, 64>}, {pipeline_mode = #tpu.pipeline_mode<synchronous>, transform_indices = @transform_18, window_bounds = array<i64: 64, 32>}, {pipeline_mode = #tpu.pipeline_mode<synchronous>, transform_indices = @transform_19, window_bounds = array<i64: 1, 32>}, {pipeline_mode = #tpu.pipeline_mode<synchronous>, transform_indices = @transform_20, window_bounds = array<i64: 1, 32>}, {pipeline_mode = #tpu.pipeline_mode<synchronous>, transform_indices = @transform_21, window_bounds = array<i64: 1, 32>}, {pipeline_mode = #tpu.pipeline_mode<synchronous>, transform_indices = @transform_22, window_bounds = array<i64: 32, 1>}, {pipeline_mode = #tpu.pipeline_mode<synchronous>, transform_indices = @transform_23, window_bounds = array<i64: 1, 1>}, {transform_indices = @transform_24, window_bounds = array<i64: 1, 1, 1>}]} {
    %c0_i32 = arith.constant 0 : i32
    %0 = arith.cmpi eq, %arg1, %c0_i32 : i32
    %1 = arith.extui %0 : i1 to i32
    %c0_i32_0 = arith.constant 0 : i32
    %2 = arith.cmpi ne, %1, %c0_i32_0 : i32
    scf.if %2 {
      %c0_65 = arith.constant 0 : index
      %c0_66 = arith.constant 0 : index
      %c0_67 = arith.constant 0 : index
      %121 = vector.load %arg2[%c0_65, %c0_66, %c0_67] : memref<1x8x32xf32, #tpu.memory_space<vmem>>, vector<1x8x32xf32>
      %122 = vector.shape_cast %121 : vector<1x8x32xf32> to vector<8x32xf32>
      %cst_68 = arith.constant 5.65685415 : f32
      %123 = vector.broadcast %cst_68 : f32 to vector<8x32xf32>
      %124 = arith.mulf %122, %123 : vector<8x32xf32>
      %c0_69 = arith.constant 0 : index
      %c0_70 = arith.constant 0 : index
      %125 = vector.load %arg3[%c0_69, %c0_70] : memref<8x32xf32, #tpu.memory_space<vmem>>, vector<8x32xf32>
      %126 = arith.addf %124, %125 : vector<8x32xf32>
      %c0_71 = arith.constant 0 : index
      %c0_72 = arith.constant 0 : index
      %127 = vector.load %arg27[%c0_71, %c0_72] : memref<8x32xf32, #tpu.memory_space<vmem>>, vector<8x32xf32>
      tpu.vector_store %arg27[%c0_71, %c0_72], %126 {strides = array<i32>} : memref<8x32xf32, #tpu.memory_space<vmem>>, vector<8x32xf32>,
    } else {
    }
    %c0 = arith.constant 0 : index
    %c0_1 = arith.constant 0 : index
    %3 = vector.load %arg27[%c0, %c0_1] : memref<8x32xf32, #tpu.memory_space<vmem>>, vector<8x32xf32>
    %4 = arith.truncf %3 : vector<8x32xf32> to vector<8x32xbf16>
    %5 = vector.shape_cast %4 : vector<8x32xbf16> to vector<1x8x32xbf16>
    %6 = vector.shape_cast %5 : vector<1x8x32xbf16> to vector<1x8x32xbf16>
    %7 = vector.broadcast %6 : vector<1x8x32xbf16> to vector<4x8x32xbf16>
    %c0_2 = arith.constant 0 : index
    %c0_3 = arith.constant 0 : index
    %c0_4 = arith.constant 0 : index
    %c0_5 = arith.constant 0 : index
    %8 = vector.load %arg4[%c0_2, %c0_3, %c0_4, %c0_5] : memref<1x4x32x24xbf16, #tpu.memory_space<vmem>>, vector<1x4x32x24xbf16>
    %9 = vector.shape_cast %8 : vector<1x4x32x24xbf16> to vector<4x32x24xbf16>
    %cst = arith.constant dense<0.000000e+00> : vector<4x8x24xf32>
    %10 = tpu.matmul %7, %9, %cst {dimension_numbers = #tpu.dot_dimension_numbers<[2], [1], [1], [2], [0, 0, 0, 1, 1, 2], [0], [0]>} : vector<4x8x32xbf16>, vector<4x32x24xbf16>, vector<4x8x24xf32> -> vector<4x8x24xf32>
    %c0_6 = arith.constant 0 : index
    %c0_7 = arith.constant 0 : index
    %c0_8 = arith.constant 0 : index
    %c0_9 = arith.constant 0 : index
    %11 = vector.load %arg5[%c0_6, %c0_7, %c0_8, %c0_9] : memref<1x4x1x24xf32, #tpu.memory_space<vmem>>, vector<1x4x1x24xf32>
    %12 = vector.shape_cast %11 : vector<1x4x1x24xf32> to vector<4x1x24xf32>
    %13 = vector.broadcast %12 : vector<4x1x24xf32> to vector<4x8x24xf32>
    %14 = arith.addf %10, %13 : vector<4x8x24xf32>
    %15 = vector.extract_strided_slice %14 {offsets = [0, 0, 0], sizes = [4, 8, 8], strides = [1, 1, 1]} : vector<4x8x24xf32> to vector<4x8x8xf32>
    %16 = vector.extract_strided_slice %14 {offsets = [0, 0, 8], sizes = [4, 8, 8], strides = [1, 1, 1]} : vector<4x8x24xf32> to vector<4x8x8xf32>
    %17 = vector.extract_strided_slice %14 {offsets = [0, 0, 16], sizes = [4, 8, 8], strides = [1, 1, 1]} : vector<4x8x24xf32> to vector<4x8x8xf32>
    %18 = arith.truncf %15 : vector<4x8x8xf32> to vector<4x8x8xbf16>
    %19 = arith.truncf %16 : vector<4x8x8xf32> to vector<4x8x8xbf16>
    %cst_10 = arith.constant dense<0.000000e+00> : vector<4x8x8xf32>
    %20 = tpu.matmul %18, %19, %cst_10 {dimension_numbers = #tpu.dot_dimension_numbers<[2], [2], [1], [1], [0, 0, 0, 1, 1, 1], [0], [0]>} : vector<4x8x8xbf16>, vector<4x8x8xbf16>, vector<4x8x8xf32> -> vector<4x8x8xf32>
    %cst_11 = arith.constant dense<0xFF800000> : vector<4x8xf32>
    %21 = vector.multi_reduction <maximumf>, %20, %cst_11 [2] : vector<4x8x8xf32> to vector<4x8xf32>
    %22 = vector.shape_cast %21 : vector<4x8xf32> to vector<4x8x1xf32>
    %23 = vector.broadcast %22 : vector<4x8x1xf32> to vector<4x8x8xf32>
    %24 = arith.subf %20, %23 : vector<4x8x8xf32>
    %25 = math.exp %24 : vector<4x8x8xf32>
    %cst_12 = arith.constant dense<0.000000e+00> : vector<4x8xf32>
    %26 = vector.multi_reduction <add>, %25, %cst_12 [2] : vector<4x8x8xf32> to vector<4x8xf32>
    %27 = vector.shape_cast %26 : vector<4x8xf32> to vector<4x8x1xf32>
    %28 = tpu.reciprocal %27 {approx = true} : vector<4x8x1xf32> -> vector<4x8x1xf32>
    %29 = vector.broadcast %28 : vector<4x8x1xf32> to vector<4x8x8xf32>
    %30 = arith.mulf %25, %29 : vector<4x8x8xf32>
    %31 = arith.truncf %30 : vector<4x8x8xf32> to vector<4x8x8xbf16>
    %32 = arith.truncf %17 : vector<4x8x8xf32> to vector<4x8x8xbf16>
    %cst_13 = arith.constant dense<0.000000e+00> : vector<4x8x8xf32>
    %33 = tpu.matmul %31, %32, %cst_13 {dimension_numbers = #tpu.dot_dimension_numbers<[2], [1], [1], [2], [0, 0, 0, 1, 1, 2], [0], [0]>} : vector<4x8x8xbf16>, vector<4x8x8xbf16>, vector<4x8x8xf32> -> vector<4x8x8xf32>
    %34 = arith.truncf %33 : vector<4x8x8xf32> to vector<4x8x8xbf16>
    %c0_14 = arith.constant 0 : index
    %c0_15 = arith.constant 0 : index
    %c0_16 = arith.constant 0 : index
    %c0_17 = arith.constant 0 : index
    %35 = vector.load %arg6[%c0_14, %c0_15, %c0_16, %c0_17] : memref<1x4x8x32xbf16, #tpu.memory_space<vmem>>, vector<1x4x8x32xbf16>
    %36 = vector.shape_cast %35 : vector<1x4x8x32xbf16> to vector<4x8x32xbf16>
    %cst_18 = arith.constant dense<0.000000e+00> : vector<4x8x32xf32>
    %37 = tpu.matmul %34, %36, %cst_18 {dimension_numbers = #tpu.dot_dimension_numbers<[2], [1], [1], [2], [0, 0, 0, 1, 1, 2], [0], [0]>} : vector<4x8x8xbf16>, vector<4x8x32xbf16>, vector<4x8x32xf32> -> vector<4x8x32xf32>
    %cst_19 = arith.constant dense<0.000000e+00> : vector<8x32xf32>
    %38 = vector.multi_reduction <add>, %37, %cst_19 [0] : vector<4x8x32xf32> to vector<8x32xf32>
    %c0_20 = arith.constant 0 : index
    %c0_21 = arith.constant 0 : index
    %c0_22 = arith.constant 0 : index
    %39 = vector.load %arg7[%c0_20, %c0_21, %c0_22] : memref<1x1x32xf32, #tpu.memory_space<vmem>>, vector<1x1x32xf32>
    %40 = vector.shape_cast %39 : vector<1x1x32xf32> to vector<1x32xf32>
    %41 = vector.broadcast %40 : vector<1x32xf32> to vector<8x32xf32>
    %42 = arith.addf %38, %41 : vector<8x32xf32>
    %43 = arith.addf %3, %42 : vector<8x32xf32>
    %c0_23 = arith.constant 0 : index
    %c0_24 = arith.constant 0 : index
    %c0_25 = arith.constant 0 : index
    %44 = vector.load %arg8[%c0_23, %c0_24, %c0_25] : memref<1x1x32xf32, #tpu.memory_space<vmem>>, vector<1x1x32xf32>
    %45 = vector.shape_cast %44 : vector<1x1x32xf32> to vector<1x32xf32>
    %c0_26 = arith.constant 0 : index
    %c0_27 = arith.constant 0 : index
    %c0_28 = arith.constant 0 : index
    %46 = vector.load %arg9[%c0_26, %c0_27, %c0_28] : memref<1x1x32xf32, #tpu.memory_space<vmem>>, vector<1x1x32xf32>
    %47 = vector.shape_cast %46 : vector<1x1x32xf32> to vector<1x32xf32>
    %cst_29 = arith.constant dense<0.000000e+00> : vector<8xf32>
    %48 = vector.multi_reduction <add>, %43, %cst_29 [1] : vector<8x32xf32> to vector<8xf32>
    %49 = vector.shape_cast %48 : vector<8xf32> to vector<8x1xf32>
    %cst_30 = arith.constant 3.200000e+01 : f32
    %50 = vector.broadcast %cst_30 : f32 to vector<8x1xf32>
    %51 = arith.divf %49, %50 : vector<8x1xf32>
    %52 = vector.broadcast %51 : vector<8x1xf32> to vector<8x32xf32>
    %53 = arith.subf %43, %52 : vector<8x32xf32>
    %54 = arith.mulf %53, %53 : vector<8x32xf32>
    %cst_31 = arith.constant dense<0.000000e+00> : vector<8xf32>
    %55 = vector.multi_reduction <add>, %54, %cst_31 [1] : vector<8x32xf32> to vector<8xf32>
    %56 = vector.shape_cast %55 : vector<8xf32> to vector<8x1xf32>
    %cst_32 = arith.constant 3.200000e+01 : f32
    %57 = vector.broadcast %cst_32 : f32 to vector<8x1xf32>
    %58 = arith.divf %56, %57 : vector<8x1xf32>
    %cst_33 = arith.constant 9.99999974E-6 : f32
    %59 = vector.broadcast %cst_33 : f32 to vector<8x1xf32>
    %60 = arith.addf %58, %59 : vector<8x1xf32>
    %61 = math.rsqrt %60 : vector<8x1xf32>
    %62 = vector.broadcast %61 : vector<8x1xf32> to vector<8x32xf32>
    %63 = arith.mulf %53, %62 : vector<8x32xf32>
    %64 = vector.broadcast %45 : vector<1x32xf32> to vector<8x32xf32>
    %65 = arith.mulf %63, %64 : vector<8x32xf32>
    %66 = vector.broadcast %47 : vector<1x32xf32> to vector<8x32xf32>
    %67 = arith.addf %65, %66 : vector<8x32xf32>
    %68 = arith.truncf %67 : vector<8x32xf32> to vector<8x32xbf16>
    %c0_34 = arith.constant 0 : index
    %c0_35 = arith.constant 0 : index
    %c0_36 = arith.constant 0 : index
    %69 = vector.load %arg12[%c0_34, %c0_35, %c0_36] : memref<1x32x64xbf16, #tpu.memory_space<vmem>>, vector<1x32x64xbf16>
    %70 = vector.shape_cast %69 : vector<1x32x64xbf16> to vector<32x64xbf16>
    %cst_37 = arith.constant dense<0.000000e+00> : vector<8x64xf32>
    %71 = tpu.matmul %68, %70, %cst_37 {dimension_numbers = #tpu.dot_dimension_numbers<[1], [0], [0], [1], [0, 0, 1, 1], [], []>} : vector<8x32xbf16>, vector<32x64xbf16>, vector<8x64xf32> -> vector<8x64xf32>
    %c0_38 = arith.constant 0 : index
    %c0_39 = arith.constant 0 : index
    %c0_40 = arith.constant 0 : index
    %72 = vector.load %arg13[%c0_38, %c0_39, %c0_40] : memref<1x1x64xf32, #tpu.memory_space<vmem>>, vector<1x1x64xf32>
    %73 = vector.shape_cast %72 : vector<1x1x64xf32> to vector<1x64xf32>
    %74 = vector.broadcast %73 : vector<1x64xf32> to vector<8x64xf32>
    %75 = arith.addf %71, %74 : vector<8x64xf32>
    %cst_41 = arith.constant 5.000000e-01 : f32
    %76 = vector.broadcast %cst_41 : f32 to vector<8x64xf32>
    %77 = arith.mulf %76, %75 : vector<8x64xf32>
    %cst_42 = arith.constant 0.707106769 : f32
    %78 = vector.broadcast %cst_42 : f32 to vector<8x64xf32>
    %79 = arith.mulf %75, %78 : vector<8x64xf32>
    %80 = math.erf %79 : vector<8x64xf32>
    %cst_43 = arith.constant 1.000000e+00 : f32
    %81 = vector.broadcast %cst_43 : f32 to vector<8x64xf32>
    %82 = arith.addf %81, %80 : vector<8x64xf32>
    %83 = arith.mulf %77, %82 : vector<8x64xf32>
    %84 = arith.truncf %83 : vector<8x64xf32> to vector<8x64xbf16>
    %c0_44 = arith.constant 0 : index
    %c0_45 = arith.constant 0 : index
    %c0_46 = arith.constant 0 : index
    %85 = vector.load %arg14[%c0_44, %c0_45, %c0_46] : memref<1x64x32xbf16, #tpu.memory_space<vmem>>, vector<1x64x32xbf16>
    %86 = vector.shape_cast %85 : vector<1x64x32xbf16> to vector<64x32xbf16>
    %cst_47 = arith.constant dense<0.000000e+00> : vector<8x32xf32>
    %87 = tpu.matmul %84, %86, %cst_47 {dimension_numbers = #tpu.dot_dimension_numbers<[1], [0], [0], [1], [0, 0, 1, 1], [], []>} : vector<8x64xbf16>, vector<64x32xbf16>, vector<8x32xf32> -> vector<8x32xf32>
    %c0_48 = arith.constant 0 : index
    %c0_49 = arith.constant 0 : index
    %c0_50 = arith.constant 0 : index
    %88 = vector.load %arg15[%c0_48, %c0_49, %c0_50] : memref<1x1x32xf32, #tpu.memory_space<vmem>>, vector<1x1x32xf32>
    %89 = vector.shape_cast %88 : vector<1x1x32xf32> to vector<1x32xf32>
    %90 = vector.broadcast %89 : vector<1x32xf32> to vector<8x32xf32>
    %91 = arith.addf %87, %90 : vector<8x32xf32>
    %92 = arith.addf %67, %91 : vector<8x32xf32>
    %c0_51 = arith.constant 0 : index
    %c0_52 = arith.constant 0 : index
    %c0_53 = arith.constant 0 : index
    %93 = vector.load %arg10[%c0_51, %c0_52, %c0_53] : memref<1x1x32xf32, #tpu.memory_space<vmem>>, vector<1x1x32xf32>
    %94 = vector.shape_cast %93 : vector<1x1x32xf32> to vector<1x32xf32>
    %c0_54 = arith.constant 0 : index
    %c0_55 = arith.constant 0 : index
    %c0_56 = arith.constant 0 : index
    %95 = vector.load %arg11[%c0_54, %c0_55, %c0_56] : memref<1x1x32xf32, #tpu.memory_space<vmem>>, vector<1x1x32xf32>
    %96 = vector.shape_cast %95 : vector<1x1x32xf32> to vector<1x32xf32>
    %cst_57 = arith.constant dense<0.000000e+00> : vector<8xf32>
    %97 = vector.multi_reduction <add>, %92, %cst_57 [1] : vector<8x32xf32> to vector<8xf32>
    %98 = vector.shape_cast %97 : vector<8xf32> to vector<8x1xf32>
    %cst_58 = arith.constant 3.200000e+01 : f32
    %99 = vector.broadcast %cst_58 : f32 to vector<8x1xf32>
    %100 = arith.divf %98, %99 : vector<8x1xf32>
    %101 = vector.broadcast %100 : vector<8x1xf32> to vector<8x32xf32>
    %102 = arith.subf %92, %101 : vector<8x32xf32>
    %103 = arith.mulf %102, %102 : vector<8x32xf32>
    %cst_59 = arith.constant dense<0.000000e+00> : vector<8xf32>
    %104 = vector.multi_reduction <add>, %103, %cst_59 [1] : vector<8x32xf32> to vector<8xf32>
    %105 = vector.shape_cast %104 : vector<8xf32> to vector<8x1xf32>
    %cst_60 = arith.constant 3.200000e+01 : f32
    %106 = vector.broadcast %cst_60 : f32 to vector<8x1xf32>
    %107 = arith.divf %105, %106 : vector<8x1xf32>
    %cst_61 = arith.constant 9.99999974E-6 : f32
    %108 = vector.broadcast %cst_61 : f32 to vector<8x1xf32>
    %109 = arith.addf %107, %108 : vector<8x1xf32>
    %110 = math.rsqrt %109 : vector<8x1xf32>
    %111 = vector.broadcast %110 : vector<8x1xf32> to vector<8x32xf32>
    %112 = arith.mulf %102, %111 : vector<8x32xf32>
    %113 = vector.broadcast %94 : vector<1x32xf32> to vector<8x32xf32>
    %114 = arith.mulf %112, %113 : vector<8x32xf32>
    %115 = vector.broadcast %96 : vector<1x32xf32> to vector<8x32xf32>
    %116 = arith.addf %114, %115 : vector<8x32xf32>
    %c0_62 = arith.constant 0 : index
    %c0_63 = arith.constant 0 : index
    %117 = vector.load %arg27[%c0_62, %c0_63] : memref<8x32xf32, #tpu.memory_space<vmem>>, vector<8x32xf32>
    tpu.vector_store %arg27[%c0_62, %c0_63], %116 {strides = array<i32>} : memref<8x32xf32, #tpu.memory_space<vmem>>, vector<8x32xf32>,
    %c1_i32 = arith.constant 1 : i32
    %118 = arith.cmpi eq, %arg1, %c1_i32 : i32
    %119 = arith.extui %118 : i1 to i32
    %c0_i32_64 = arith.constant 0 : i32
    %120 = arith.cmpi ne, %119, %c0_i32_64 : i32
    scf.if %120 {
      %121 = vector.extract_strided_slice %116 {offsets = [7, 0], sizes = [1, 32], strides = [1, 1]} : vector<8x32xf32> to vector<1x32xf32>
      %c0_65 = arith.constant 0 : index
      %c0_66 = arith.constant 0 : index
      %122 = vector.load %arg16[%c0_65, %c0_66] : memref<1x32xf32, #tpu.memory_space<vmem>>, vector<1x32xf32>
      %c0_67 = arith.constant 0 : index
      %c0_68 = arith.constant 0 : index
      %123 = vector.load %arg17[%c0_67, %c0_68] : memref<1x32xf32, #tpu.memory_space<vmem>>, vector<1x32xf32>
      %cst_69 = arith.constant dense<0.000000e+00> : vector<1xf32>
      %124 = vector.multi_reduction <add>, %121, %cst_69 [1] : vector<1x32xf32> to vector<1xf32>
      %125 = vector.shape_cast %124 : vector<1xf32> to vector<1x1xf32>
      %cst_70 = arith.constant 3.200000e+01 : f32
      %126 = vector.broadcast %cst_70 : f32 to vector<1x1xf32>
      %127 = arith.divf %125, %126 : vector<1x1xf32>
      %128 = vector.broadcast %127 : vector<1x1xf32> to vector<1x32xf32>
      %129 = arith.subf %121, %128 : vector<1x32xf32>
      %130 = arith.mulf %129, %129 : vector<1x32xf32>
      %cst_71 = arith.constant dense<0.000000e+00> : vector<1xf32>
      %131 = vector.multi_reduction <add>, %130, %cst_71 [1] : vector<1x32xf32> to vector<1xf32>
      %132 = vector.shape_cast %131 : vector<1xf32> to vector<1x1xf32>
      %cst_72 = arith.constant 3.200000e+01 : f32
      %133 = vector.broadcast %cst_72 : f32 to vector<1x1xf32>
      %134 = arith.divf %132, %133 : vector<1x1xf32>
      %cst_73 = arith.constant 9.99999974E-6 : f32
      %135 = vector.broadcast %cst_73 : f32 to vector<1x1xf32>
      %136 = arith.addf %134, %135 : vector<1x1xf32>
      %137 = math.rsqrt %136 : vector<1x1xf32>
      %138 = vector.broadcast %137 : vector<1x1xf32> to vector<1x32xf32>
      %139 = arith.mulf %129, %138 : vector<1x32xf32>
      %140 = arith.mulf %139, %122 : vector<1x32xf32>
      %141 = arith.addf %140, %123 : vector<1x32xf32>
      %142 = arith.truncf %141 : vector<1x32xf32> to vector<1x32xbf16>
      %c0_74 = arith.constant 0 : index
      %c0_75 = arith.constant 0 : index
      %143 = vector.load %arg18[%c0_74, %c0_75] : memref<32x64xbf16, #tpu.memory_space<vmem>>, vector<32x64xbf16>
      %cst_76 = arith.constant dense<0.000000e+00> : vector<1x64xf32>
      %144 = tpu.matmul %142, %143, %cst_76 {dimension_numbers = #tpu.dot_dimension_numbers<[1], [0], [0], [1], [0, 0, 1, 1], [], []>} : vector<1x32xbf16>, vector<32x64xbf16>, vector<1x64xf32> -> vector<1x64xf32>
      %c0_77 = arith.constant 0 : index
      %c0_78 = arith.constant 0 : index
      %145 = vector.load %arg19[%c0_77, %c0_78] : memref<1x64xf32, #tpu.memory_space<vmem>>, vector<1x64xf32>
      %146 = arith.addf %144, %145 : vector<1x64xf32>
      %cst_79 = arith.constant 0.000000e+00 : f32
      %147 = vector.broadcast %cst_79 : f32 to vector<1x64xf32>
      %148 = arith.maximumf %146, %147 : vector<1x64xf32>
      %149 = arith.truncf %148 : vector<1x64xf32> to vector<1x64xbf16>
      %c0_80 = arith.constant 0 : index
      %c0_81 = arith.constant 0 : index
      %150 = vector.load %arg20[%c0_80, %c0_81] : memref<64x32xbf16, #tpu.memory_space<vmem>>, vector<64x32xbf16>
      %cst_82 = arith.constant dense<0.000000e+00> : vector<1x32xf32>
      %151 = tpu.matmul %149, %150, %cst_82 {dimension_numbers = #tpu.dot_dimension_numbers<[1], [0], [0], [1], [0, 0, 1, 1], [], []>} : vector<1x64xbf16>, vector<64x32xbf16>, vector<1x32xf32> -> vector<1x32xf32>
      %c0_83 = arith.constant 0 : index
      %c0_84 = arith.constant 0 : index
      %152 = vector.load %arg21[%c0_83, %c0_84] : memref<1x32xf32, #tpu.memory_space<vmem>>, vector<1x32xf32>
      %153 = arith.addf %151, %152 : vector<1x32xf32>
      %154 = arith.addf %141, %153 : vector<1x32xf32>
      %c0_85 = arith.constant 0 : index
      %c0_86 = arith.constant 0 : index
      %155 = vector.load %arg22[%c0_85, %c0_86] : memref<1x32xf32, #tpu.memory_space<vmem>>, vector<1x32xf32>
      %c0_87 = arith.constant 0 : index
      %c0_88 = arith.constant 0 : index
      %156 = vector.load %arg23[%c0_87, %c0_88] : memref<1x32xf32, #tpu.memory_space<vmem>>, vector<1x32xf32>
      %cst_89 = arith.constant dense<0.000000e+00> : vector<1xf32>
      %157 = vector.multi_reduction <add>, %154, %cst_89 [1] : vector<1x32xf32> to vector<1xf32>
      %158 = vector.shape_cast %157 : vector<1xf32> to vector<1x1xf32>
      %cst_90 = arith.constant 3.200000e+01 : f32
      %159 = vector.broadcast %cst_90 : f32 to vector<1x1xf32>
      %160 = arith.divf %158, %159 : vector<1x1xf32>
      %161 = vector.broadcast %160 : vector<1x1xf32> to vector<1x32xf32>
      %162 = arith.subf %154, %161 : vector<1x32xf32>
      %163 = arith.mulf %162, %162 : vector<1x32xf32>
      %cst_91 = arith.constant dense<0.000000e+00> : vector<1xf32>
      %164 = vector.multi_reduction <add>, %163, %cst_91 [1] : vector<1x32xf32> to vector<1xf32>
      %165 = vector.shape_cast %164 : vector<1xf32> to vector<1x1xf32>
      %cst_92 = arith.constant 3.200000e+01 : f32
      %166 = vector.broadcast %cst_92 : f32 to vector<1x1xf32>
      %167 = arith.divf %165, %166 : vector<1x1xf32>
      %cst_93 = arith.constant 9.99999974E-6 : f32
      %168 = vector.broadcast %cst_93 : f32 to vector<1x1xf32>
      %169 = arith.addf %167, %168 : vector<1x1xf32>
      %170 = math.rsqrt %169 : vector<1x1xf32>
      %171 = vector.broadcast %170 : vector<1x1xf32> to vector<1x32xf32>
      %172 = arith.mulf %162, %171 : vector<1x32xf32>
      %173 = arith.mulf %172, %155 : vector<1x32xf32>
      %174 = arith.addf %173, %156 : vector<1x32xf32>
      %175 = arith.truncf %174 : vector<1x32xf32> to vector<1x32xbf16>
      %c0_94 = arith.constant 0 : index
      %c0_95 = arith.constant 0 : index
      %176 = vector.load %arg24[%c0_94, %c0_95] : memref<32x1xbf16, #tpu.memory_space<vmem>>, vector<32x1xbf16>
      %cst_96 = arith.constant dense<0.000000e+00> : vector<1x1xf32>
      %177 = tpu.matmul %175, %176, %cst_96 {dimension_numbers = #tpu.dot_dimension_numbers<[1], [0], [0], [1], [0, 0, 1, 1], [], []>} : vector<1x32xbf16>, vector<32x1xbf16>, vector<1x1xf32> -> vector<1x1xf32>
      %c0_97 = arith.constant 0 : index
      %c0_98 = arith.constant 0 : index
      %178 = vector.load %arg25[%c0_97, %c0_98] : memref<1x1xf32, #tpu.memory_space<vmem>>, vector<1x1xf32>
      %179 = arith.addf %177, %178 : vector<1x1xf32>
      %cst_99 = arith.constant 0.000000e+00 : f32
      %180 = vector.broadcast %cst_99 : f32 to vector<1x1xf32>
      %181 = arith.subf %180, %179 : vector<1x1xf32>
      %182 = math.exp %181 : vector<1x1xf32>
      %cst_100 = arith.constant 1.000000e+00 : f32
      %183 = vector.broadcast %cst_100 : f32 to vector<1x1xf32>
      %184 = arith.addf %183, %182 : vector<1x1xf32>
      %185 = tpu.reciprocal %184 {approx = true} : vector<1x1xf32> -> vector<1x1xf32>
      %c0_101 = arith.constant 0 : index
      %c0_102 = arith.constant 0 : index
      %c0_103 = arith.constant 0 : index
      %186 = vector.load %arg26[%c0_101, %c0_102, %c0_103] : memref<1x1x1xf32, #tpu.memory_space<vmem>>, vector<1x1x1xf32>
      %187 = vector.shape_cast %186 : vector<1x1x1xf32> to vector<1x1xf32>
      %188 = vector.shape_cast %185 : vector<1x1xf32> to vector<1x1x1xf32>
      tpu.vector_store %arg26[%c0_101, %c0_102, %c0_103], %188 {strides = array<i32>} : memref<1x1x1xf32, #tpu.memory_space<vmem>>, vector<1x1x1xf32>,
    } else {
    }
    return
  }
  func.func @transform_0(%arg0: i32, %arg1: i32) -> (i32, i32, i32) {
    %c0_i32 = arith.constant 0 : i32
    %c0_i32_0 = arith.constant 0 : i32
    %c0_i32_1 = arith.constant 0 : i32
    return %arg0, %c0_i32, %c0_i32_0 : i32, i32, i32
  }
  func.func @transform_1(%arg0: i32, %arg1: i32) -> (i32, i32) {
    %c0_i32 = arith.constant 0 : i32
    %c0_i32_0 = arith.constant 0 : i32
    %c0_i32_1 = arith.constant 0 : i32
    return %c0_i32, %c0_i32_0 : i32, i32
  }
  func.func @transform_2(%arg0: i32, %arg1: i32) -> (i32, i32, i32, i32) {
    %c0_i32 = arith.constant 0 : i32
    %c0_i32_0 = arith.constant 0 : i32
    %c0_i32_1 = arith.constant 0 : i32
    %c0_i32_2 = arith.constant 0 : i32
    return %arg1, %c0_i32, %c0_i32_0, %c0_i32_1 : i32, i32, i32, i32
  }
  func.func @transform_3(%arg0: i32, %arg1: i32) -> (i32, i32, i32, i32) {
    %c0_i32 = arith.constant 0 : i32
    %c0_i32_0 = arith.constant 0 : i32
    %c0_i32_1 = arith.constant 0 : i32
    %c0_i32_2 = arith.constant 0 : i32
    return %arg1, %c0_i32, %c0_i32_0, %c0_i32_1 : i32, i32, i32, i32
  }
  func.func @transform_4(%arg0: i32, %arg1: i32) -> (i32, i32, i32, i32) {
    %c0_i32 = arith.constant 0 : i32
    %c0_i32_0 = arith.constant 0 : i32
    %c0_i32_1 = arith.constant 0 : i32
    %c0_i32_2 = arith.constant 0 : i32
    return %arg1, %c0_i32, %c0_i32_0, %c0_i32_1 : i32, i32, i32, i32
  }
  func.func @transform_5(%arg0: i32, %arg1: i32) -> (i32, i32, i32) {
    %c0_i32 = arith.constant 0 : i32
    %c0_i32_0 = arith.constant 0 : i32
    %c0_i32_1 = arith.constant 0 : i32
    return %arg1, %c0_i32, %c0_i32_0 : i32, i32, i32
  }
  func.func @transform_6(%arg0: i32, %arg1: i32) -> (i32, i32, i32) {
    %c0_i32 = arith.constant 0 : i32
    %c0_i32_0 = arith.constant 0 : i32
    %c0_i32_1 = arith.constant 0 : i32
    return %arg1, %c0_i32, %c0_i32_0 : i32, i32, i32
  }
  func.func @transform_7(%arg0: i32, %arg1: i32) -> (i32, i32, i32) {
    %c0_i32 = arith.constant 0 : i32
    %c0_i32_0 = arith.constant 0 : i32
    %c0_i32_1 = arith.constant 0 : i32
    return %arg1, %c0_i32, %c0_i32_0 : i32, i32, i32
  }
  func.func @transform_8(%arg0: i32, %arg1: i32) -> (i32, i32, i32) {
    %c0_i32 = arith.constant 0 : i32
    %c0_i32_0 = arith.constant 0 : i32
    %c0_i32_1 = arith.constant 0 : i32
    return %arg1, %c0_i32, %c0_i32_0 : i32, i32, i32
  }
  func.func @transform_9(%arg0: i32, %arg1: i32) -> (i32, i32, i32) {
    %c0_i32 = arith.constant 0 : i32
    %c0_i32_0 = arith.constant 0 : i32
    %c0_i32_1 = arith.constant 0 : i32
    return %arg1, %c0_i32, %c0_i32_0 : i32, i32, i32
  }
  func.func @transform_10(%arg0: i32, %arg1: i32) -> (i32, i32, i32) {
    %c0_i32 = arith.constant 0 : i32
    %c0_i32_0 = arith.constant 0 : i32
    %c0_i32_1 = arith.constant 0 : i32
    return %arg1, %c0_i32, %c0_i32_0 : i32, i32, i32
  }
  func.func @transform_11(%arg0: i32, %arg1: i32) -> (i32, i32, i32) {
    %c0_i32 = arith.constant 0 : i32
    %c0_i32_0 = arith.constant 0 : i32
    %c0_i32_1 = arith.constant 0 : i32
    return %arg1, %c0_i32, %c0_i32_0 : i32, i32, i32
  }
  func.func @transform_12(%arg0: i32, %arg1: i32) -> (i32, i32, i32) {
    %c0_i32 = arith.constant 0 : i32
    %c0_i32_0 = arith.constant 0 : i32
    %c0_i32_1 = arith.constant 0 : i32
    return %arg1, %c0_i32, %c0_i32_0 : i32, i32, i32
  }
  func.func @transform_13(%arg0: i32, %arg1: i32) -> (i32, i32, i32) {
    %c0_i32 = arith.constant 0 : i32
    %c0_i32_0 = arith.constant 0 : i32
    %c0_i32_1 = arith.constant 0 : i32
    return %arg1, %c0_i32, %c0_i32_0 : i32, i32, i32
  }
  func.func @transform_14(%arg0: i32, %arg1: i32) -> (i32, i32) {
    %c0_i32 = arith.constant 0 : i32
    %c0_i32_0 = arith.constant 0 : i32
    %c0_i32_1 = arith.constant 0 : i32
    return %c0_i32, %c0_i32_0 : i32, i32
  }
  func.func @transform_15(%arg0: i32, %arg1: i32) -> (i32, i32) {
    %c0_i32 = arith.constant 0 : i32
    %c0_i32_0 = arith.constant 0 : i32
    %c0_i32_1 = arith.constant 0 : i32
    return %c0_i32, %c0_i32_0 : i32, i32
  }
  func.func @transform_16(%arg0: i32, %arg1: i32) -> (i32, i32) {
    %c0_i32 = arith.constant 0 : i32
    %c0_i32_0 = arith.constant 0 : i32
    %c0_i32_1 = arith.constant 0 : i32
    return %c0_i32, %c0_i32_0 : i32, i32
  }
  func.func @transform_17(%arg0: i32, %arg1: i32) -> (i32, i32) {
    %c0_i32 = arith.constant 0 : i32
    %c0_i32_0 = arith.constant 0 : i32
    %c0_i32_1 = arith.constant 0 : i32
    return %c0_i32, %c0_i32_0 : i32, i32
  }
  func.func @transform_18(%arg0: i32, %arg1: i32) -> (i32, i32) {
    %c0_i32 = arith.constant 0 : i32
    %c0_i32_0 = arith.constant 0 : i32
    %c0_i32_1 = arith.constant 0 : i32
    return %c0_i32, %c0_i32_0 : i32, i32
  }
  func.func @transform_19(%arg0: i32, %arg1: i32) -> (i32, i32) {
    %c0_i32 = arith.constant 0 : i32
    %c0_i32_0 = arith.constant 0 : i32
    %c0_i32_1 = arith.constant 0 : i32
    return %c0_i32, %c0_i32_0 : i32, i32
  }
  func.func @transform_20(%arg0: i32, %arg1: i32) -> (i32, i32) {
    %c0_i32 = arith.constant 0 : i32
    %c0_i32_0 = arith.constant 0 : i32
    %c0_i32_1 = arith.constant 0 : i32
    return %c0_i32, %c0_i32_0 : i32, i32
  }
  func.func @transform_21(%arg0: i32, %arg1: i32) -> (i32, i32) {
    %c0_i32 = arith.constant 0 : i32
    %c0_i32_0 = arith.constant 0 : i32
    %c0_i32_1 = arith.constant 0 : i32
    return %c0_i32, %c0_i32_0 : i32, i32
  }
  func.func @transform_22(%arg0: i32, %arg1: i32) -> (i32, i32) {
    %c0_i32 = arith.constant 0 : i32
    %c0_i32_0 = arith.constant 0 : i32
    %c0_i32_1 = arith.constant 0 : i32
    return %c0_i32, %c0_i32_0 : i32, i32
  }
  func.func @transform_23(%arg0: i32, %arg1: i32) -> (i32, i32) {
    %c0_i32 = arith.constant 0 : i32
    %c0_i32_0 = arith.constant 0 : i32
    %c0_i32_1 = arith.constant 0 : i32
    return %c0_i32, %c0_i32_0 : i32, i32
  }
  func.func @transform_24(%arg0: i32, %arg1: i32) -> (i32, i32, i32) {
    %c0_i32 = arith.constant 0 : i32
    %c0_i32_0 = arith.constant 0 : i32
    %c0_i32_1 = arith.constant 0 : i32
    return %arg0, %c0_i32, %c0_i32_0 : i32, i32, i32
  }
}

</mosaic_0001>

<llo_original>
// kernel: tpu_custom_call.1
$region0: #{tpu_custom_call.1}
  #allocation0 [shape = 'u32[]', space=smem, size = 0x4, offset = 0x4, fixed_abs, tag = 'smem constant byte address 0x4 - core index']
  #allocation1 [shape = 'u32[144,128]{1,0:T(1,128)}', space=vmem, size = 0x12000, scoped, tag = 'internal scratch']
  #allocation2 [shape = 'f32[8,32]{1,0:T(8,128)}', space=vmem, size = 0x1000, scoped, tag = 'scratch operand']
  #allocation3 [shape = 'f32[1,1]{1,0:T(1,128)S(1)}', space=vmem, size = 0x200, scoped, tag = 'scoped memory for tpu_custom_call.1']
  %s0 = inlined_call_operand.vmem [shape: f32[2,8,32], index: 0, kind: input, shape index: {}]
  %s1 = inlined_call_operand.vmem [shape: f32[8,32], index: 1, kind: input, shape index: {}]
  %s2 = inlined_call_operand.vmem [shape: bf16[2,4,32,24], index: 2, kind: input, shape index: {}]
  %s3 = inlined_call_operand.vmem [shape: f32[2,4,1,24], index: 3, kind: input, shape index: {}]
  %s4 = inlined_call_operand.vmem [shape: bf16[2,4,8,32], index: 4, kind: input, shape index: {}]
  %s5 = inlined_call_operand.vmem [shape: f32[2,1,32], index: 5, kind: input, shape index: {}]
  %s6 = inlined_call_operand.vmem [shape: f32[2,1,32], index: 6, kind: input, shape index: {}]
  %s7 = inlined_call_operand.vmem [shape: f32[2,1,32], index: 7, kind: input, shape index: {}]
  %s8 = inlined_call_operand.vmem [shape: f32[2,1,32], index: 8, kind: input, shape index: {}]
  %s9 = inlined_call_operand.vmem [shape: f32[2,1,32], index: 9, kind: input, shape index: {}]
  %s10 = inlined_call_operand.vmem [shape: bf16[2,32,64], index: 10, kind: input, shape index: {}]
  %s11 = inlined_call_operand.vmem [shape: f32[2,1,64], index: 11, kind: input, shape index: {}]
  %s12 = inlined_call_operand.vmem [shape: bf16[2,64,32], index: 12, kind: input, shape index: {}]
  %s13 = inlined_call_operand.vmem [shape: f32[2,1,32], index: 13, kind: input, shape index: {}]
  %s14 = inlined_call_operand.vmem [shape: f32[1,32], index: 14, kind: input, shape index: {}]
  %s15 = inlined_call_operand.vmem [shape: f32[1,32], index: 15, kind: input, shape index: {}]
  %s16 = inlined_call_operand.vmem [shape: bf16[32,64], index: 16, kind: input, shape index: {}]
  %s17 = inlined_call_operand.vmem [shape: f32[1,64], index: 17, kind: input, shape index: {}]
  %s18 = inlined_call_operand.vmem [shape: bf16[64,32], index: 18, kind: input, shape index: {}]
  %s19 = inlined_call_operand.vmem [shape: f32[1,32], index: 19, kind: input, shape index: {}]
  %s20 = inlined_call_operand.vmem [shape: f32[1,32], index: 20, kind: input, shape index: {}]
  %s21 = inlined_call_operand.vmem [shape: f32[1,32], index: 21, kind: input, shape index: {}]
  %s22 = inlined_call_operand.vmem [shape: bf16[32,1], index: 22, kind: input, shape index: {}]
  %s23 = inlined_call_operand.<no memory space> [shape: f32[1,1], index: 23, kind: input, shape index: {}]
  %s24 = inlined_call_operand.vmem [shape: f32[2,1,1], index: 24, kind: output, shape index: {}]
  %s25 = sld [smem:[#allocation0]]
  $region137: #{tpu_custom_call.1} parent=0
    _
  %s27 = ssub.s32 1, %s25
  %s28 = scalar_select 0, %s27, %s25
  %v29 = vstv %s23
  %30 = vst [vmem:[#allocation3] sm:$0x1] %v29
  loop: start=0, step=1, limit=6
  $region2: #{tpu_custom_call.1} parent=0 // loop_pre_header
    _
  $region3: #{tpu_custom_call.1} parent=0 // loop_header
    %s32 = sphi 0, %s36
    %p33 = scmp.ge.s32.totalorder %s32, 6
    %s39 = sphi 0, %s51
    %s40 = sphi 0, %s47
    %s41 = sphi 0, %s39
    %s42 = sphi 0, %s40
    %s43 = sphi 0, %s41
    %s44 = sphi 0, %s42
    %s54 = sphi 0, %s56
    %s57 = sphi 0, %s54
    %s58 = sphi 0, %s57
    %s74 = sphi 0, %s58
    %s78 = sphi 0, %s78
    %s80 = sphi 0, %s78
    %s81 = sphi 0, %s80
    %s95 = sphi 0, %s81
    %s101 = sphi 0, %s103
    %s104 = sphi 0, %s101
    %s105 = sphi 0, %s104
    %s121 = sphi 0, %s105
    %s127 = sphi 0, %s129
    %s130 = sphi 0, %s127
    %s131 = sphi 0, %s130
    %s147 = sphi 0, %s131
    %s153 = sphi 0, %s155
    %s156 = sphi 0, %s153
    %s157 = sphi 0, %s156
    %s173 = sphi 0, %s157
    %s179 = sphi 0, %s181
    %s182 = sphi 0, %s179
    %s183 = sphi 0, %s182
    %s199 = sphi 0, %s183
    %s205 = sphi 0, %s207
    %s208 = sphi 0, %s205
    %s209 = sphi 0, %s208
    %s225 = sphi 0, %s209
    %s231 = sphi 0, %s233
    %s234 = sphi 0, %s231
    %s235 = sphi 0, %s234
    %s251 = sphi 0, %s235
    %s257 = sphi 0, %s259
    %s260 = sphi 0, %s257
    %s261 = sphi 0, %s260
    %s277 = sphi 0, %s261
    %s283 = sphi 0, %s285
    %s286 = sphi 0, %s283
    %s287 = sphi 0, %s286
    %s303 = sphi 0, %s287
    %s309 = sphi 0, %s311
    %s312 = sphi 0, %s309
    %s313 = sphi 0, %s312
    %s329 = sphi 0, %s313
    %s335 = sphi 0, %s337
    %s338 = sphi 0, %s335
    %s339 = sphi 0, %s338
    %s355 = sphi 0, %s339
    %s361 = sphi 0, %s363
    %s364 = sphi 0, %s361
    %s365 = sphi 0, %s364
    %s381 = sphi 0, %s365
    %s387 = sphi 0, %s389
    %s390 = sphi 0, %s387
    %s391 = sphi 0, %s390
    %s407 = sphi 0, %s391
    %s411 = sphi 0, %s411
    %s413 = sphi 0, %s411
    %s414 = sphi 0, %s413
    %s428 = sphi 0, %s414
    %s432 = sphi 0, %s432
    %s434 = sphi 0, %s432
    %s435 = sphi 0, %s434
    %s449 = sphi 0, %s435
    %s453 = sphi 0, %s453
    %s455 = sphi 0, %s453
    %s456 = sphi 0, %s455
    %s470 = sphi 0, %s456
    %s474 = sphi 0, %s474
    %s476 = sphi 0, %s474
    %s477 = sphi 0, %s476
    %s491 = sphi 0, %s477
    %s495 = sphi 0, %s495
    %s497 = sphi 0, %s495
    %s498 = sphi 0, %s497
    %s512 = sphi 0, %s498
    %s516 = sphi 0, %s516
    %s518 = sphi 0, %s516
    %s519 = sphi 0, %s518
    %s533 = sphi 0, %s519
    %s537 = sphi 0, %s537
    %s539 = sphi 0, %s537
    %s540 = sphi 0, %s539
    %s554 = sphi 0, %s540
    %s558 = sphi 0, %s558
    %s560 = sphi 0, %s558
    %s561 = sphi 0, %s560
    %s575 = sphi 0, %s561
    %s579 = sphi 0, %s579
    %s581 = sphi 0, %s579
    %s582 = sphi 0, %s581
    %s596 = sphi 0, %s582
    %s600 = sphi 0, %s600
    %s602 = sphi 0, %s600
    %s603 = sphi 0, %s602
    %s617 = sphi 0, %s603
    %s623 = sphi 0, %s625
    %s626 = sphi 0, %s623
    %s627 = sphi 0, %s626
    %s643 = sphi 0, %s627
  $region4: #{tpu_custom_call.1} parent=0 // loop_header_branch
    %35 = sbr.rel (%p33) target = $region8
  $region5: #{tpu_custom_call.1} parent=0 // loop_body
    %s37 = ssub.s32 %s32, 1
    %s38 = ssub.s32 %s32, 2
    %s45 = sadd.s32 1, %s40
    %p46 = scmp.ge.s32.totalorder %s45, 2
    %s47 = scalar_select %p46, 0, %s45
    %s48 = sadd.s32 1, %s39
    %s49 = scalar_select %p46, %s48, %s39
    %p50 = scmp.ge.s32.totalorder %s49, 2
    %s51 = scalar_select %p50, 0, %s49
    %s52 = ssub.s32 %s39, %s51
    %p53 = scmp.eq.s32.totalorder %s52, 0
    %s55 = sadd.s32 %s54, 1
    %s56 = scalar_select %p53, %s54, %s55
    %p59 = pneg %p53
    %p60 = scmp.eq.s32.totalorder %s32, 3
    %p61 = por %p59, %p60
    %p62 = scmp.ne.s32.totalorder %s54, %s57
    %p63 = scmp.eq.s32.totalorder %s32, 0
    %p64 = por %p62, %p63
    %p65 = scmp.ne.s32.totalorder %s54, %s57
    %p66 = scmp.eq.s32.totalorder %s37, 3
    %p67 = por %p65, %p66
    %p68 = scmp.ne.s32.totalorder %s57, %s58
    %p69 = scmp.eq.s32.totalorder %s37, 0
    %p70 = por %p68, %p69
    %p71 = scmp.ne.s32.totalorder %s57, %s58
    %p72 = scmp.eq.s32.totalorder %s38, 3
    %p73 = por %p71, %p72
    %p75 = scmp.ne.s32.totalorder %s58, %s74
    %p76 = scmp.eq.s32.totalorder %s38, 0
    %p77 = por %p75, %p76
    %s79 = sadd.s32 %s78, 1
    %p82 = scmp.eq.s32.totalorder %s32, 3
    %p83 = scmp.ne.s32.totalorder %s78, %s80
    %p84 = scmp.eq.s32.totalorder %s32, 0
    %p85 = por %p83, %p84
    %p86 = scmp.ne.s32.totalorder %s78, %s80
    %p87 = scmp.eq.s32.totalorder %s37, 3
    %p88 = por %p86, %p87
    %p89 = scmp.ne.s32.totalorder %s80, %s81
    %p90 = scmp.eq.s32.totalorder %s37, 0
    %p91 = por %p89, %p90
    %p92 = scmp.ne.s32.totalorder %s80, %s81
    %p93 = scmp.eq.s32.totalorder %s38, 3
    %p94 = por %p92, %p93
    %p96 = scmp.ne.s32.totalorder %s81, %s95
    %p97 = scmp.eq.s32.totalorder %s38, 0
    %p98 = por %p96, %p97
    %s99 = ssub.s32 %s40, %s47
    %p100 = scmp.eq.s32.totalorder %s99, 0
    %s102 = sadd.s32 %s101, 1
    %s103 = scalar_select %p100, %s101, %s102
    %p106 = pneg %p100
    %p107 = scmp.eq.s32.totalorder %s32, 3
    %p108 = por %p106, %p107
    %p109 = scmp.ne.s32.totalorder %s101, %s104
    %p110 = scmp.eq.s32.totalorder %s32, 0
    %p111 = por %p109, %p110
    %p112 = scmp.ne.s32.totalorder %s101, %s104
    %p113 = scmp.eq.s32.totalorder %s37, 3
    %p114 = por %p112, %p113
    %p115 = scmp.ne.s32.totalorder %s104, %s105
    %p116 = scmp.eq.s32.totalorder %s37, 0
    %p117 = por %p115, %p116
    %p118 = scmp.ne.s32.totalorder %s104, %s105
    %p119 = scmp.eq.s32.totalorder %s38, 3
    %p120 = por %p118, %p119
    %p122 = scmp.ne.s32.totalorder %s105, %s121
    %p123 = scmp.eq.s32.totalorder %s38, 0
    %p124 = por %p122, %p123
    %s125 = ssub.s32 %s40, %s47
    %p126 = scmp.eq.s32.totalorder %s125, 0
    %s128 = sadd.s32 %s127, 1
    %s129 = scalar_select %p126, %s127, %s128
    %p132 = pneg %p126
    %p133 = scmp.eq.s32.totalorder %s32, 3
    %p134 = por %p132, %p133
    %p135 = scmp.ne.s32.totalorder %s127, %s130
    %p136 = scmp.eq.s32.totalorder %s32, 0
    %p137 = por %p135, %p136
    %p138 = scmp.ne.s32.totalorder %s127, %s130
    %p139 = scmp.eq.s32.totalorder %s37, 3
    %p140 = por %p138, %p139
    %p141 = scmp.ne.s32.totalorder %s130, %s131
    %p142 = scmp.eq.s32.totalorder %s37, 0
    %p143 = por %p141, %p142
    %p144 = scmp.ne.s32.totalorder %s130, %s131
    %p145 = scmp.eq.s32.totalorder %s38, 3
    %p146 = por %p144, %p145
    %p148 = scmp.ne.s32.totalorder %s131, %s147
    %p149 = scmp.eq.s32.totalorder %s38, 0
    %p150 = por %p148, %p149
    %s151 = ssub.s32 %s40, %s47
    %p152 = scmp.eq.s32.totalorder %s151, 0
    %s154 = sadd.s32 %s153, 1
    %s155 = scalar_select %p152, %s153, %s154
    %p158 = pneg %p152
    %p159 = scmp.eq.s32.totalorder %s32, 3
    %p160 = por %p158, %p159
    %p161 = scmp.ne.s32.totalorder %s153, %s156
    %p162 = scmp.eq.s32.totalorder %s32, 0
    %p163 = por %p161, %p162
    %p164 = scmp.ne.s32.totalorder %s153, %s156
    %p165 = scmp.eq.s32.totalorder %s37, 3
    %p166 = por %p164, %p165
    %p167 = scmp.ne.s32.totalorder %s156, %s157
    %p168 = scmp.eq.s32.totalorder %s37, 0
    %p169 = por %p167, %p168
    %p170 = scmp.ne.s32.totalorder %s156, %s157
    %p171 = scmp.eq.s32.totalorder %s38, 3
    %p172 = por %p170, %p171
    %p174 = scmp.ne.s32.totalorder %s157, %s173
    %p175 = scmp.eq.s32.totalorder %s38, 0
    %p176 = por %p174, %p175
    %s177 = ssub.s32 %s40, %s47
    %p178 = scmp.eq.s32.totalorder %s177, 0
    %s180 = sadd.s32 %s179, 1
    %s181 = scalar_select %p178, %s179, %s180
    %p184 = pneg %p178
    %p185 = scmp.eq.s32.totalorder %s32, 3
    %p186 = por %p184, %p185
    %p187 = scmp.ne.s32.totalorder %s179, %s182
    %p188 = scmp.eq.s32.totalorder %s32, 0
    %p189 = por %p187, %p188
    %p190 = scmp.ne.s32.totalorder %s179, %s182
    %p191 = scmp.eq.s32.totalorder %s37, 3
    %p192 = por %p190, %p191
    %p193 = scmp.ne.s32.totalorder %s182, %s183
    %p194 = scmp.eq.s32.totalorder %s37, 0
    %p195 = por %p193, %p194
    %p196 = scmp.ne.s32.totalorder %s182, %s183
    %p197 = scmp.eq.s32.totalorder %s38, 3
    %p198 = por %p196, %p197
    %p200 = scmp.ne.s32.totalorder %s183, %s199
    %p201 = scmp.eq.s32.totalorder %s38, 0
    %p202 = por %p200, %p201
    %s203 = ssub.s32 %s40, %s47
    %p204 = scmp.eq.s32.totalorder %s203, 0
    %s206 = sadd.s32 %s205, 1
    %s207 = scalar_select %p204, %s205, %s206
    %p210 = pneg %p204
    %p211 = scmp.eq.s32.totalorder %s32, 3
    %p212 = por %p210, %p211
    %p213 = scmp.ne.s32.totalorder %s205, %s208
    %p214 = scmp.eq.s32.totalorder %s32, 0
    %p215 = por %p213, %p214
    %p216 = scmp.ne.s32.totalorder %s205, %s208
    %p217 = scmp.eq.s32.totalorder %s37, 3
    %p218 = por %p216, %p217
    %p219 = scmp.ne.s32.totalorder %s208, %s209
    %p220 = scmp.eq.s32.totalorder %s37, 0
    %p221 = por %p219, %p220
    %p222 = scmp.ne.s32.totalorder %s208, %s209
    %p223 = scmp.eq.s32.totalorder %s38, 3
    %p224 = por %p222, %p223
    %p226 = scmp.ne.s32.totalorder %s209, %s225
    %p227 = scmp.eq.s32.totalorder %s38, 0
    %p228 = por %p226, %p227
    %s229 = ssub.s32 %s40, %s47
    %p230 = scmp.eq.s32.totalorder %s229, 0
    %s232 = sadd.s32 %s231, 1
    %s233 = scalar_select %p230, %s231, %s232
    %p236 = pneg %p230
    %p237 = scmp.eq.s32.totalorder %s32, 3
    %p238 = por %p236, %p237
    %p239 = scmp.ne.s32.totalorder %s231, %s234
    %p240 = scmp.eq.s32.totalorder %s32, 0
    %p241 = por %p239, %p240
    %p242 = scmp.ne.s32.totalorder %s231, %s234
    %p243 = scmp.eq.s32.totalorder %s37, 3
    %p244 = por %p242, %p243
    %p245 = scmp.ne.s32.totalorder %s234, %s235
    %p246 = scmp.eq.s32.totalorder %s37, 0
    %p247 = por %p245, %p246
    %p248 = scmp.ne.s32.totalorder %s234, %s235
    %p249 = scmp.eq.s32.totalorder %s38, 3
    %p250 = por %p248, %p249
    %p252 = scmp.ne.s32.totalorder %s235, %s251
    %p253 = scmp.eq.s32.totalorder %s38, 0
    %p254 = por %p252, %p253
    %s255 = ssub.s32 %s40, %s47
    %p256 = scmp.eq.s32.totalorder %s255, 0
    %s258 = sadd.s32 %s257, 1
    %s259 = scalar_select %p256, %s257, %s258
    %p262 = pneg %p256
    %p263 = scmp.eq.s32.totalorder %s32, 3
    %p264 = por %p262, %p263
    %p265 = scmp.ne.s32.totalorder %s257, %s260
    %p266 = scmp.eq.s32.totalorder %s32, 0
    %p267 = por %p265, %p266
    %p268 = scmp.ne.s32.totalorder %s257, %s260
    %p269 = scmp.eq.s32.totalorder %s37, 3
    %p270 = por %p268, %p269
    %p271 = scmp.ne.s32.totalorder %s260, %s261
    %p272 = scmp.eq.s32.totalorder %s37, 0
    %p273 = por %p271, %p272
    %p274 = scmp.ne.s32.totalorder %s260, %s261
    %p275 = scmp.eq.s32.totalorder %s38, 3
    %p276 = por %p274, %p275
    %p278 = scmp.ne.s32.totalorder %s261, %s277
    %p279 = scmp.eq.s32.totalorder %s38, 0
    %p280 = por %p278, %p279
    %s281 = ssub.s32 %s40, %s47
    %p282 = scmp.eq.s32.totalorder %s281, 0
    %s284 = sadd.s32 %s283, 1
    %s285 = scalar_select %p282, %s283, %s284
    %p288 = pneg %p282
    %p289 = scmp.eq.s32.totalorder %s32, 3
    %p290 = por %p288, %p289
    %p291 = scmp.ne.s32.totalorder %s283, %s286
    %p292 = scmp.eq.s32.totalorder %s32, 0
    %p293 = por %p291, %p292
    %p294 = scmp.ne.s32.totalorder %s283, %s286
    %p295 = scmp.eq.s32.totalorder %s37, 3
    %p296 = por %p294, %p295
    %p297 = scmp.ne.s32.totalorder %s286, %s287
    %p298 = scmp.eq.s32.totalorder %s37, 0
    %p299 = por %p297, %p298
    %p300 = scmp.ne.s32.totalorder %s286, %s287
    %p301 = scmp.eq.s32.totalorder %s38, 3
    %p302 = por %p300, %p301
    %p304 = scmp.ne.s32.totalorder %s287, %s303
    %p305 = scmp.eq.s32.totalorder %s38, 0
    %p306 = por %p304, %p305
    %s307 = ssub.s32 %s40, %s47
    %p308 = scmp.eq.s32.totalorder %s307, 0
    %s310 = sadd.s32 %s309, 1
    %s311 = scalar_select %p308, %s309, %s310
    %p314 = pneg %p308
    %p315 = scmp.eq.s32.totalorder %s32, 3
    %p316 = por %p314, %p315
    %p317 = scmp.ne.s32.totalorder %s309, %s312
    %p318 = scmp.eq.s32.totalorder %s32, 0
    %p319 = por %p317, %p318
    %p320 = scmp.ne.s32.totalorder %s309, %s312
    %p321 = scmp.eq.s32.totalorder %s37, 3
    %p322 = por %p320, %p321
    %p323 = scmp.ne.s32.totalorder %s312, %s313
    %p324 = scmp.eq.s32.totalorder %s37, 0
    %p325 = por %p323, %p324
    %p326 = scmp.ne.s32.totalorder %s312, %s313
    %p327 = scmp.eq.s32.totalorder %s38, 3
    %p328 = por %p326, %p327
    %p330 = scmp.ne.s32.totalorder %s313, %s329
    %p331 = scmp.eq.s32.totalorder %s38, 0
    %p332 = por %p330, %p331
    %s333 = ssub.s32 %s40, %s47
    %p334 = scmp.eq.s32.totalorder %s333, 0
    %s336 = sadd.s32 %s335, 1
    %s337 = scalar_select %p334, %s335, %s336
    %p340 = pneg %p334
    %p341 = scmp.eq.s32.totalorder %s32, 3
    %p342 = por %p340, %p341
    %p343 = scmp.ne.s32.totalorder %s335, %s338
    %p344 = scmp.eq.s32.totalorder %s32, 0
    %p345 = por %p343, %p344
    %p346 = scmp.ne.s32.totalorder %s335, %s338
    %p347 = scmp.eq.s32.totalorder %s37, 3
    %p348 = por %p346, %p347
    %p349 = scmp.ne.s32.totalorder %s338, %s339
    %p350 = scmp.eq.s32.totalorder %s37, 0
    %p351 = por %p349, %p350
    %p352 = scmp.ne.s32.totalorder %s338, %s339
    %p353 = scmp.eq.s32.totalorder %s38, 3
    %p354 = por %p352, %p353
    %p356 = scmp.ne.s32.totalorder %s339, %s355
    %p357 = scmp.eq.s32.totalorder %s38, 0
    %p358 = por %p356, %p357
    %s359 = ssub.s32 %s40, %s47
    %p360 = scmp.eq.s32.totalorder %s359, 0
    %s362 = sadd.s32 %s361, 1
    %s363 = scalar_select %p360, %s361, %s362
    %p366 = pneg %p360
    %p367 = scmp.eq.s32.totalorder %s32, 3
    %p368 = por %p366, %p367
    %p369 = scmp.ne.s32.totalorder %s361, %s364
    %p370 = scmp.eq.s32.totalorder %s32, 0
    %p371 = por %p369, %p370
    %p372 = scmp.ne.s32.totalorder %s361, %s364
    %p373 = scmp.eq.s32.totalorder %s37, 3
    %p374 = por %p372, %p373
    %p375 = scmp.ne.s32.totalorder %s364, %s365
    %p376 = scmp.eq.s32.totalorder %s37, 0
    %p377 = por %p375, %p376
    %p378 = scmp.ne.s32.totalorder %s364, %s365
    %p379 = scmp.eq.s32.totalorder %s38, 3
    %p380 = por %p378, %p379
    %p382 = scmp.ne.s32.totalorder %s365, %s381
    %p383 = scmp.eq.s32.totalorder %s38, 0
    %p384 = por %p382, %p383
    %s385 = ssub.s32 %s40, %s47
    %p386 = scmp.eq.s32.totalorder %s385, 0
    %s388 = sadd.s32 %s387, 1
    %s389 = scalar_select %p386, %s387, %s388
    %p392 = pneg %p386
    %p393 = scmp.eq.s32.totalorder %s32, 3
    %p394 = por %p392, %p393
    %p395 = scmp.ne.s32.totalorder %s387, %s390
    %p396 = scmp.eq.s32.totalorder %s32, 0
    %p397 = por %p395, %p396
    %p398 = scmp.ne.s32.totalorder %s387, %s390
    %p399 = scmp.eq.s32.totalorder %s37, 3
    %p400 = por %p398, %p399
    %p401 = scmp.ne.s32.totalorder %s390, %s391
    %p402 = scmp.eq.s32.totalorder %s37, 0
    %p403 = por %p401, %p402
    %p404 = scmp.ne.s32.totalorder %s390, %s391
    %p405 = scmp.eq.s32.totalorder %s38, 3
    %p406 = por %p404, %p405
    %p408 = scmp.ne.s32.totalorder %s391, %s407
    %p409 = scmp.eq.s32.totalorder %s38, 0
    %p410 = por %p408, %p409
    %s412 = sadd.s32 %s411, 1
    %p415 = scmp.eq.s32.totalorder %s32, 3
    %p416 = scmp.ne.s32.totalorder %s411, %s413
    %p417 = scmp.eq.s32.totalorder %s32, 0
    %p418 = por %p416, %p417
    %p419 = scmp.ne.s32.totalorder %s411, %s413
    %p420 = scmp.eq.s32.totalorder %s37, 3
    %p421 = por %p419, %p420
    %p422 = scmp.ne.s32.totalorder %s413, %s414
    %p423 = scmp.eq.s32.totalorder %s37, 0
    %p424 = por %p422, %p423
    %p425 = scmp.ne.s32.totalorder %s413, %s414
    %p426 = scmp.eq.s32.totalorder %s38, 3
    %p427 = por %p425, %p426
    %p429 = scmp.ne.s32.totalorder %s414, %s428
    %p430 = scmp.eq.s32.totalorder %s38, 0
    %p431 = por %p429, %p430
    %s433 = sadd.s32 %s432, 1
    %p436 = scmp.eq.s32.totalorder %s32, 3
    %p437 = scmp.ne.s32.totalorder %s432, %s434
    %p438 = scmp.eq.s32.totalorder %s32, 0
    %p439 = por %p437, %p438
    %p440 = scmp.ne.s32.totalorder %s432, %s434
    %p441 = scmp.eq.s32.totalorder %s37, 3
    %p442 = por %p440, %p441
    %p443 = scmp.ne.s32.totalorder %s434, %s435
    %p444 = scmp.eq.s32.totalorder %s37, 0
    %p445 = por %p443, %p444
    %p446 = scmp.ne.s32.totalorder %s434, %s435
    %p447 = scmp.eq.s32.totalorder %s38, 3
    %p448 = por %p446, %p447
    %p450 = scmp.ne.s32.totalorder %s435, %s449
    %p451 = scmp.eq.s32.totalorder %s38, 0
    %p452 = por %p450, %p451
    %s454 = sadd.s32 %s453, 1
    %p457 = scmp.eq.s32.totalorder %s32, 3
    %p458 = scmp.ne.s32.totalorder %s453, %s455
    %p459 = scmp.eq.s32.totalorder %s32, 0
    %p460 = por %p458, %p459
    %p461 = scmp.ne.s32.totalorder %s453, %s455
    %p462 = scmp.eq.s32.totalorder %s37, 3
    %p463 = por %p461, %p462
    %p464 = scmp.ne.s32.totalorder %s455, %s456
    %p465 = scmp.eq.s32.totalorder %s37, 0
    %p466 = por %p464, %p465
    %p467 = scmp.ne.s32.totalorder %s455, %s456
    %p468 = scmp.eq.s32.totalorder %s38, 3
    %p469 = por %p467, %p468
    %p471 = scmp.ne.s32.totalorder %s456, %s470
    %p472 = scmp.eq.s32.totalorder %s38, 0
    %p473 = por %p471, %p472
    %s475 = sadd.s32 %s474, 1
    %p478 = scmp.eq.s32.totalorder %s32, 3
    %p479 = scmp.ne.s32.totalorder %s474, %s476
    %p480 = scmp.eq.s32.totalorder %s32, 0
    %p481 = por %p479, %p480
    %p482 = scmp.ne.s32.totalorder %s474, %s476
    %p483 = scmp.eq.s32.totalorder %s37, 3
    %p484 = por %p482, %p483
    %p485 = scmp.ne.s32.totalorder %s476, %s477
    %p486 = scmp.eq.s32.totalorder %s37, 0
    %p487 = por %p485, %p486
    %p488 = scmp.ne.s32.totalorder %s476, %s477
    %p489 = scmp.eq.s32.totalorder %s38, 3
    %p490 = por %p488, %p489
    %p492 = scmp.ne.s32.totalorder %s477, %s491
    %p493 = scmp.eq.s32.totalorder %s38, 0
    %p494 = por %p492, %p493
    %s496 = sadd.s32 %s495, 1
    %p499 = scmp.eq.s32.totalorder %s32, 3
    %p500 = scmp.ne.s32.totalorder %s495, %s497
    %p501 = scmp.eq.s32.totalorder %s32, 0
    %p502 = por %p500, %p501
    %p503 = scmp.ne.s32.totalorder %s495, %s497
    %p504 = scmp.eq.s32.totalorder %s37, 3
    %p505 = por %p503, %p504
    %p506 = scmp.ne.s32.totalorder %s497, %s498
    %p507 = scmp.eq.s32.totalorder %s37, 0
    %p508 = por %p506, %p507
    %p509 = scmp.ne.s32.totalorder %s497, %s498
    %p510 = scmp.eq.s32.totalorder %s38, 3
    %p511 = por %p509, %p510
    %p513 = scmp.ne.s32.totalorder %s498, %s512
    %p514 = scmp.eq.s32.totalorder %s38, 0
    %p515 = por %p513, %p514
    %s517 = sadd.s32 %s516, 1
    %p520 = scmp.eq.s32.totalorder %s32, 3
    %p521 = scmp.ne.s32.totalorder %s516, %s518
    %p522 = scmp.eq.s32.totalorder %s32, 0
    %p523 = por %p521, %p522
    %p524 = scmp.ne.s32.totalorder %s516, %s518
    %p525 = scmp.eq.s32.totalorder %s37, 3
    %p526 = por %p524, %p525
    %p527 = scmp.ne.s32.totalorder %s518, %s519
    %p528 = scmp.eq.s32.totalorder %s37, 0
    %p529 = por %p527, %p528
    %p530 = scmp.ne.s32.totalorder %s518, %s519
    %p531 = scmp.eq.s32.totalorder %s38, 3
    %p532 = por %p530, %p531
    %p534 = scmp.ne.s32.totalorder %s519, %s533
    %p535 = scmp.eq.s32.totalorder %s38, 0
    %p536 = por %p534, %p535
    %s538 = sadd.s32 %s537, 1
    %p541 = scmp.eq.s32.totalorder %s32, 3
    %p542 = scmp.ne.s32.totalorder %s537, %s539
    %p543 = scmp.eq.s32.totalorder %s32, 0
    %p544 = por %p542, %p543
    %p545 = scmp.ne.s32.totalorder %s537, %s539
    %p546 = scmp.eq.s32.totalorder %s37, 3
    %p547 = por %p545, %p546
    %p548 = scmp.ne.s32.totalorder %s539, %s540
    %p549 = scmp.eq.s32.totalorder %s37, 0
    %p550 = por %p548, %p549
    %p551 = scmp.ne.s32.totalorder %s539, %s540
    %p552 = scmp.eq.s32.totalorder %s38, 3
    %p553 = por %p551, %p552
    %p555 = scmp.ne.s32.totalorder %s540, %s554
    %p556 = scmp.eq.s32.totalorder %s38, 0
    %p557 = por %p555, %p556
    %s559 = sadd.s32 %s558, 1
    %p562 = scmp.eq.s32.totalorder %s32, 3
    %p563 = scmp.ne.s32.totalorder %s558, %s560
    %p564 = scmp.eq.s32.totalorder %s32, 0
    %p565 = por %p563, %p564
    %p566 = scmp.ne.s32.totalorder %s558, %s560
    %p567 = scmp.eq.s32.totalorder %s37, 3
    %p568 = por %p566, %p567
    %p569 = scmp.ne.s32.totalorder %s560, %s561
    %p570 = scmp.eq.s32.totalorder %s37, 0
    %p571 = por %p569, %p570
    %p572 = scmp.ne.s32.totalorder %s560, %s561
    %p573 = scmp.eq.s32.totalorder %s38, 3
    %p574 = por %p572, %p573
    %p576 = scmp.ne.s32.totalorder %s561, %s575
    %p577 = scmp.eq.s32.totalorder %s38, 0
    %p578 = por %p576, %p577
    %s580 = sadd.s32 %s579, 1
    %p583 = scmp.eq.s32.totalorder %s32, 3
    %p584 = scmp.ne.s32.totalorder %s579, %s581
    %p585 = scmp.eq.s32.totalorder %s32, 0
    %p586 = por %p584, %p585
    %p587 = scmp.ne.s32.totalorder %s579, %s581
    %p588 = scmp.eq.s32.totalorder %s37, 3
    %p589 = por %p587, %p588
    %p590 = scmp.ne.s32.totalorder %s581, %s582
    %p591 = scmp.eq.s32.totalorder %s37, 0
    %p592 = por %p590, %p591
    %p593 = scmp.ne.s32.totalorder %s581, %s582
    %p594 = scmp.eq.s32.totalorder %s38, 3
    %p595 = por %p593, %p594
    %p597 = scmp.ne.s32.totalorder %s582, %s596
    %p598 = scmp.eq.s32.totalorder %s38, 0
    %p599 = por %p597, %p598
    %s601 = sadd.s32 %s600, 1
    %p604 = scmp.eq.s32.totalorder %s32, 3
    %p605 = scmp.ne.s32.totalorder %s600, %s602
    %p606 = scmp.eq.s32.totalorder %s32, 0
    %p607 = por %p605, %p606
    %p608 = scmp.ne.s32.totalorder %s600, %s602
    %p609 = scmp.eq.s32.totalorder %s37, 3
    %p610 = por %p608, %p609
    %p611 = scmp.ne.s32.totalorder %s602, %s603
    %p612 = scmp.eq.s32.totalorder %s37, 0
    %p613 = por %p611, %p612
    %p614 = scmp.ne.s32.totalorder %s602, %s603
    %p615 = scmp.eq.s32.totalorder %s38, 3
    %p616 = por %p614, %p615
    %p618 = scmp.ne.s32.totalorder %s603, %s617
    %p619 = scmp.eq.s32.totalorder %s38, 0
    %p620 = por %p618, %p619
    %s621 = ssub.s32 %s39, %s51
    %p622 = scmp.eq.s32.totalorder %s621, 0
    %s624 = sadd.s32 %s623, 1
    %s625 = scalar_select %p622, %s623, %s624
    %p628 = pneg %p622
    %p629 = scmp.eq.s32.totalorder %s32, 3
    %p630 = por %p628, %p629
    %p631 = scmp.ne.s32.totalorder %s623, %s626
    %p632 = scmp.eq.s32.totalorder %s32, 0
    %p633 = por %p631, %p632
    %p634 = scmp.ne.s32.totalorder %s623, %s626
    %p635 = scmp.eq.s32.totalorder %s37, 3
    %p636 = por %p634, %p635
    %p637 = scmp.ne.s32.totalorder %s626, %s627
    %p638 = scmp.eq.s32.totalorder %s37, 0
    %p639 = por %p637, %p638
    %p640 = scmp.ne.s32.totalorder %s626, %s627
    %p641 = scmp.eq.s32.totalorder %s38, 3
    %p642 = por %p640, %p641
    %p644 = scmp.ne.s32.totalorder %s627, %s643
    %p645 = scmp.eq.s32.totalorder %s38, 0
    %p646 = por %p644, %p645
    %p647 = scmp.le.s32.totalorder 1, %s32
    %p648 = scmp.lt.s32.totalorder %s32, 5
    %p649 = pnand %p647, %p648
    %p650 = pneg %p649
    // Predicated region
    $region9: #{tpu_custom_call.1} parent=5 // pred_check
      _
    $region10: #{tpu_custom_call.1} parent=5 // pred_check_branch
      %652 = sbr.rel (%p649) target = $region12
    $region11: #{tpu_custom_call.1} parent=5 // pred_region
      %s653 = ssub.s32 %s32, 1
      // Predicated region
      $region13: #{tpu_custom_call.1} parent=11 // pred_check
        %p654 = pneg %p91
      $region14: #{tpu_custom_call.1} parent=11 // pred_check_branch
        %656 = sbr.rel (%p654) target = $region16
      $region15: #{tpu_custom_call.1} parent=11 // pred_region
        _
      $region16: #{tpu_custom_call.1} parent=11 // pred_fallthru
        _
      // Predicated region
      $region17: #{tpu_custom_call.1} parent=11 // pred_check
        %p657 = pneg %p424
      $region18: #{tpu_custom_call.1} parent=11 // pred_check_branch
        %659 = sbr.rel (%p657) target = $region20
      $region19: #{tpu_custom_call.1} parent=11 // pred_region
        _
      $region20: #{tpu_custom_call.1} parent=11 // pred_fallthru
        _
      // Predicated region
      $region21: #{tpu_custom_call.1} parent=11 // pred_check
        %p660 = pneg %p445
      $region22: #{tpu_custom_call.1} parent=11 // pred_check_branch
        %662 = sbr.rel (%p660) target = $region24
      $region23: #{tpu_custom_call.1} parent=11 // pred_region
        _
      $region24: #{tpu_custom_call.1} parent=11 // pred_fallthru
        _
      // Predicated region
      $region25: #{tpu_custom_call.1} parent=11 // pred_check
        %p663 = pneg %p466
      $region26: #{tpu_custom_call.1} parent=11 // pred_check_branch
        %665 = sbr.rel (%p663) target = $region28
      $region27: #{tpu_custom_call.1} parent=11 // pred_region
        _
      $region28: #{tpu_custom_call.1} parent=11 // pred_fallthru
        _
      // Predicated region
      $region29: #{tpu_custom_call.1} parent=11 // pred_check
        %p666 = pneg %p487
      $region30: #{tpu_custom_call.1} parent=11 // pred_check_branch
        %668 = sbr.rel (%p666) target = $region32
      $region31: #{tpu_custom_call.1} parent=11 // pred_region
        _
      $region32: #{tpu_custom_call.1} parent=11 // pred_fallthru
        _
      // Predicated region
      $region33: #{tpu_custom_call.1} parent=11 // pred_check
        %p669 = pneg %p508
      $region34: #{tpu_custom_call.1} parent=11 // pred_check_branch
        %671 = sbr.rel (%p669) target = $region36
      $region35: #{tpu_custom_call.1} parent=11 // pred_region
        _
      $region36: #{tpu_custom_call.1} parent=11 // pred_fallthru
        _
      // Predicated region
      $region37: #{tpu_custom_call.1} parent=11 // pred_check
        %p672 = pneg %p529
      $region38: #{tpu_custom_call.1} parent=11 // pred_check_branch
        %674 = sbr.rel (%p672) target = $region40
      $region39: #{tpu_custom_call.1} parent=11 // pred_region
        _
      $region40: #{tpu_custom_call.1} parent=11 // pred_fallthru
        _
      // Predicated region
      $region41: #{tpu_custom_call.1} parent=11 // pred_check
        %p675 = pneg %p550
      $region42: #{tpu_custom_call.1} parent=11 // pred_check_branch
        %677 = sbr.rel (%p675) target = $region44
      $region43: #{tpu_custom_call.1} parent=11 // pred_region
        _
      $region44: #{tpu_custom_call.1} parent=11 // pred_fallthru
        _
      // Predicated region
      $region45: #{tpu_custom_call.1} parent=11 // pred_check
        %p678 = pneg %p571
      $region46: #{tpu_custom_call.1} parent=11 // pred_check_branch
        %680 = sbr.rel (%p678) target = $region48
      $region47: #{tpu_custom_call.1} parent=11 // pred_region
        _
      $region48: #{tpu_custom_call.1} parent=11 // pred_fallthru
        _
      // Predicated region
      $region49: #{tpu_custom_call.1} parent=11 // pred_check
        %p681 = pneg %p592
      $region50: #{tpu_custom_call.1} parent=11 // pred_check_branch
        %683 = sbr.rel (%p681) target = $region52
      $region51: #{tpu_custom_call.1} parent=11 // pred_region
        _
      $region52: #{tpu_custom_call.1} parent=11 // pred_fallthru
        _
      // Predicated region
      $region53: #{tpu_custom_call.1} parent=11 // pred_check
        %p684 = pneg %p613
      $region54: #{tpu_custom_call.1} parent=11 // pred_check_branch
        %686 = sbr.rel (%p684) target = $region56
      $region55: #{tpu_custom_call.1} parent=11 // pred_region
        _
      $region56: #{tpu_custom_call.1} parent=11 // pred_fallthru
        _
    $region12: #{tpu_custom_call.1} parent=5 // pred_fallthru
      _
    %p687 = scmp.lt.s32.totalorder %s32, 4
    // Predicated region
    $region57: #{tpu_custom_call.1} parent=5 // pred_check
      %p688 = pneg %p687
    $region58: #{tpu_custom_call.1} parent=5 // pred_check_branch
      %690 = sbr.rel (%p688) target = $region60
    $region59: #{tpu_custom_call.1} parent=5 // pred_region
      // Predicated region
      $region61: #{tpu_custom_call.1} parent=59 // pred_check
        %p691 = pneg %p64
      $region62: #{tpu_custom_call.1} parent=59 // pred_check_branch
        %693 = sbr.rel (%p691) target = $region64
      $region63: #{tpu_custom_call.1} parent=59 // pred_region
        %p694 = scmp.lt.s32.totalorder %s39, 1
        %s695 = scalar_select %p694, %s39, 1
        %s696 = smul.addr %s695, 8
        %s697 = scalar_lea.vmem %s0, %s696
      $region64: #{tpu_custom_call.1} parent=59 // pred_fallthru
        _
      // Predicated region
      $region65: #{tpu_custom_call.1} parent=59 // pred_check
        %p698 = pneg %p111
      $region66: #{tpu_custom_call.1} parent=59 // pred_check_branch
        %700 = sbr.rel (%p698) target = $region68
      $region67: #{tpu_custom_call.1} parent=59 // pred_region
        %p701 = scmp.lt.s32.totalorder %s40, 1
        %s702 = scalar_select %p701, %s40, 1
        %s703 = smul.addr %s702, 16
        %s704 = smul.addr %s703, 4
        %s705 = scalar_lea.vmem %s2, %s704
      $region68: #{tpu_custom_call.1} parent=59 // pred_fallthru
        _
      // Predicated region
      $region69: #{tpu_custom_call.1} parent=59 // pred_check
        %p706 = pneg %p137
      $region70: #{tpu_custom_call.1} parent=59 // pred_check_branch
        %708 = sbr.rel (%p706) target = $region72
      $region71: #{tpu_custom_call.1} parent=59 // pred_region
        %p709 = scmp.lt.s32.totalorder %s40, 1
        %s710 = scalar_select %p709, %s40, 1
        %s711 = smul.addr %s710, 4
        %s712 = scalar_lea.vmem %s3, %s711
      $region72: #{tpu_custom_call.1} parent=59 // pred_fallthru
        _
      // Predicated region
      $region73: #{tpu_custom_call.1} parent=59 // pred_check
        %p713 = pneg %p163
      $region74: #{tpu_custom_call.1} parent=59 // pred_check_branch
        %715 = sbr.rel (%p713) target = $region76
      $region75: #{tpu_custom_call.1} parent=59 // pred_region
        %p716 = scmp.lt.s32.totalorder %s40, 1
        %s717 = scalar_select %p716, %s40, 1
        %s718 = smul.addr %s717, 4
        %s719 = smul.addr %s718, 4
        %s720 = scalar_lea.vmem %s4, %s719
      $region76: #{tpu_custom_call.1} parent=59 // pred_fallthru
        _
      // Predicated region
      $region77: #{tpu_custom_call.1} parent=59 // pred_check
        %p721 = pneg %p189
      $region78: #{tpu_custom_call.1} parent=59 // pred_check_branch
        %723 = sbr.rel (%p721) target = $region80
      $region79: #{tpu_custom_call.1} parent=59 // pred_region
        %p724 = scmp.lt.s32.totalorder %s40, 1
        %s725 = scalar_select %p724, %s40, 1
        %s726 = scalar_lea.vmem %s5, %s725
      $region80: #{tpu_custom_call.1} parent=59 // pred_fallthru
        _
      // Predicated region
      $region81: #{tpu_custom_call.1} parent=59 // pred_check
        %p727 = pneg %p215
      $region82: #{tpu_custom_call.1} parent=59 // pred_check_branch
        %729 = sbr.rel (%p727) target = $region84
      $region83: #{tpu_custom_call.1} parent=59 // pred_region
        %p730 = scmp.lt.s32.totalorder %s40, 1
        %s731 = scalar_select %p730, %s40, 1
        %s732 = scalar_lea.vmem %s6, %s731
      $region84: #{tpu_custom_call.1} parent=59 // pred_fallthru
        _
      // Predicated region
      $region85: #{tpu_custom_call.1} parent=59 // pred_check
        %p733 = pneg %p241
      $region86: #{tpu_custom_call.1} parent=59 // pred_check_branch
        %735 = sbr.rel (%p733) target = $region88
      $region87: #{tpu_custom_call.1} parent=59 // pred_region
        %p736 = scmp.lt.s32.totalorder %s40, 1
        %s737 = scalar_select %p736, %s40, 1
        %s738 = scalar_lea.vmem %s7, %s737
      $region88: #{tpu_custom_call.1} parent=59 // pred_fallthru
        _
      // Predicated region
      $region89: #{tpu_custom_call.1} parent=59 // pred_check
        %p739 = pneg %p267
      $region90: #{tpu_custom_call.1} parent=59 // pred_check_branch
        %741 = sbr.rel (%p739) target = $region92
      $region91: #{tpu_custom_call.1} parent=59 // pred_region
        %p742 = scmp.lt.s32.totalorder %s40, 1
        %s743 = scalar_select %p742, %s40, 1
        %s744 = scalar_lea.vmem %s8, %s743
      $region92: #{tpu_custom_call.1} parent=59 // pred_fallthru
        _
      // Predicated region
      $region93: #{tpu_custom_call.1} parent=59 // pred_check
        %p745 = pneg %p293
      $region94: #{tpu_custom_call.1} parent=59 // pred_check_branch
        %747 = sbr.rel (%p745) target = $region96
      $region95: #{tpu_custom_call.1} parent=59 // pred_region
        %p748 = scmp.lt.s32.totalorder %s40, 1
        %s749 = scalar_select %p748, %s40, 1
        %s750 = scalar_lea.vmem %s9, %s749
      $region96: #{tpu_custom_call.1} parent=59 // pred_fallthru
        _
      // Predicated region
      $region97: #{tpu_custom_call.1} parent=59 // pred_check
        %p751 = pneg %p319
      $region98: #{tpu_custom_call.1} parent=59 // pred_check_branch
        %753 = sbr.rel (%p751) target = $region100
      $region99: #{tpu_custom_call.1} parent=59 // pred_region
        %p754 = scmp.lt.s32.totalorder %s40, 1
        %s755 = scalar_select %p754, %s40, 1
        %s756 = smul.addr %s755, 4
        %s757 = smul.addr %s756, 4
        %s758 = scalar_lea.vmem %s10, %s757
      $region100: #{tpu_custom_call.1} parent=59 // pred_fallthru
        _
      // Predicated region
      $region101: #{tpu_custom_call.1} parent=59 // pred_check
        %p759 = pneg %p345
      $region102: #{tpu_custom_call.1} parent=59 // pred_check_branch
        %761 = sbr.rel (%p759) target = $region104
      $region103: #{tpu_custom_call.1} parent=59 // pred_region
        %p762 = scmp.lt.s32.totalorder %s40, 1
        %s763 = scalar_select %p762, %s40, 1
        %s764 = scalar_lea.vmem %s11, %s763
      $region104: #{tpu_custom_call.1} parent=59 // pred_fallthru
        _
      // Predicated region
      $region105: #{tpu_custom_call.1} parent=59 // pred_check
        %p765 = pneg %p371
      $region106: #{tpu_custom_call.1} parent=59 // pred_check_branch
        %767 = sbr.rel (%p765) target = $region108
      $region107: #{tpu_custom_call.1} parent=59 // pred_region
        %p768 = scmp.lt.s32.totalorder %s40, 1
        %s769 = scalar_select %p768, %s40, 1
        %s770 = smul.addr %s769, 8
        %s771 = smul.addr %s770, 4
        %s772 = scalar_lea.vmem %s12, %s771
      $region108: #{tpu_custom_call.1} parent=59 // pred_fallthru
        _
      // Predicated region
      $region109: #{tpu_custom_call.1} parent=59 // pred_check
        %p773 = pneg %p397
      $region110: #{tpu_custom_call.1} parent=59 // pred_check_branch
        %775 = sbr.rel (%p773) target = $region112
      $region111: #{tpu_custom_call.1} parent=59 // pred_region
        %p776 = scmp.lt.s32.totalorder %s40, 1
        %s777 = scalar_select %p776, %s40, 1
        %s778 = scalar_lea.vmem %s13, %s777
      $region112: #{tpu_custom_call.1} parent=59 // pred_fallthru
        _
    $region60: #{tpu_custom_call.1} parent=5 // pred_fallthru
      _
    %p779 = scmp.le.s32.totalorder 1, %s32
    %p780 = scmp.lt.s32.totalorder %s32, 5
    %p781 = pnand %p779, %p780
    %p782 = pneg %p781
    // Predicated region
    $region113: #{tpu_custom_call.1} parent=5 // pred_check
      _
    $region114: #{tpu_custom_call.1} parent=5 // pred_check_branch
      %784 = sbr.rel (%p781) target = $region116
    $region115: #{tpu_custom_call.1} parent=5 // pred_region
      %s785 = ssub.s32 %s32, 1
      %p786 = scmp.lt.s32.totalorder %s41, 1
      %s787 = scalar_select %p786, %s41, 1
      %s788 = smul.addr %s787, 8
      %s789 = scalar_lea.vmem %s0, %s788
      %p790 = pneg %p70
      %p791 = pneg %p67
      %p792 = pneg %p91
      %p793 = pneg %p88
      %p794 = scmp.lt.s32.totalorder %s42, 1
      %s795 = scalar_select %p794, %s42, 1
      %s796 = smul.addr %s795, 16
      %s797 = smul.addr %s796, 4
      %s798 = scalar_lea.vmem %s2, %s797
      %p799 = pneg %p117
      %p800 = pneg %p114
      %p801 = scmp.lt.s32.totalorder %s42, 1
      %s802 = scalar_select %p801, %s42, 1
      %s803 = smul.addr %s802, 4
      %s804 = scalar_lea.vmem %s3, %s803
      %p805 = pneg %p143
      %p806 = pneg %p140
      %p807 = scmp.lt.s32.totalorder %s42, 1
      %s808 = scalar_select %p807, %s42, 1
      %s809 = smul.addr %s808, 4
      %s810 = smul.addr %s809, 4
      %s811 = scalar_lea.vmem %s4, %s810
      %p812 = pneg %p169
      %p813 = pneg %p166
      %p814 = scmp.lt.s32.totalorder %s42, 1
      %s815 = scalar_select %p814, %s42, 1
      %s816 = scalar_lea.vmem %s5, %s815
      %p817 = pneg %p195
      %p818 = pneg %p192
      %p819 = scmp.lt.s32.totalorder %s42, 1
      %s820 = scalar_select %p819, %s42, 1
      %s821 = scalar_lea.vmem %s6, %s820
      %p822 = pneg %p221
      %p823 = pneg %p218
      %p824 = scmp.lt.s32.totalorder %s42, 1
      %s825 = scalar_select %p824, %s42, 1
      %s826 = scalar_lea.vmem %s7, %s825
      %p827 = pneg %p247
      %p828 = pneg %p244
      %p829 = scmp.lt.s32.totalorder %s42, 1
      %s830 = scalar_select %p829, %s42, 1
      %s831 = scalar_lea.vmem %s8, %s830
      %p832 = pneg %p273
      %p833 = pneg %p270
      %p834 = scmp.lt.s32.totalorder %s42, 1
      %s835 = scalar_select %p834, %s42, 1
      %s836 = scalar_lea.vmem %s9, %s835
      %p837 = pneg %p299
      %p838 = pneg %p296
      %p839 = scmp.lt.s32.totalorder %s42, 1
      %s840 = scalar_select %p839, %s42, 1
      %s841 = smul.addr %s840, 4
      %s842 = smul.addr %s841, 4
      %s843 = scalar_lea.vmem %s10, %s842
      %p844 = pneg %p325
      %p845 = pneg %p322
      %p846 = scmp.lt.s32.totalorder %s42, 1
      %s847 = scalar_select %p846, %s42, 1
      %s848 = scalar_lea.vmem %s11, %s847
      %p849 = pneg %p351
      %p850 = pneg %p348
      %p851 = scmp.lt.s32.totalorder %s42, 1
      %s852 = scalar_select %p851, %s42, 1
      %s853 = smul.addr %s852, 8
      %s854 = smul.addr %s853, 4
      %s855 = scalar_lea.vmem %s12, %s854
      %p856 = pneg %p377
      %p857 = pneg %p374
      %p858 = scmp.lt.s32.totalorder %s42, 1
      %s859 = scalar_select %p858, %s42, 1
      %s860 = scalar_lea.vmem %s13, %s859
      %p861 = pneg %p403
      %p862 = pneg %p400
      %p863 = pneg %p424
      %p864 = pneg %p421
      %p865 = pneg %p445
      %p866 = pneg %p442
      %p867 = pneg %p466
      %p868 = pneg %p463
      %p869 = pneg %p487
      %p870 = pneg %p484
      %p871 = pneg %p508
      %p872 = pneg %p505
      %p873 = pneg %p529
      %p874 = pneg %p526
      %p875 = pneg %p550
      %p876 = pneg %p547
      %p877 = pneg %p571
      %p878 = pneg %p568
      %p879 = pneg %p592
      %p880 = pneg %p589
      %p881 = pneg %p613
      %p882 = pneg %p610
      %p883 = pneg %p639
      %p884 = pneg %p636
      %p885 = scmp.lt.s32.totalorder %s41, 1
      %s886 = scalar_select %p885, %s41, 1
      %s887 = scalar_lea.vmem %s24, %s886
      %p888 = scmp.lt.s32.totalorder %s41, 1
      %s889 = scalar_select %p888, %s41, 1
      %s890 = smul.addr %s889, 8
      %s891 = scalar_lea.vmem %s0, %s890
      %p892 = scmp.lt.s32.totalorder %s42, 1
      %s893 = scalar_select %p892, %s42, 1
      %s894 = smul.addr %s893, 16
      %s895 = smul.addr %s894, 4
      %s896 = scalar_lea.vmem %s2, %s895
      %p897 = scmp.lt.s32.totalorder %s42, 1
      %s898 = scalar_select %p897, %s42, 1
      %s899 = smul.addr %s898, 4
      %s900 = scalar_lea.vmem %s3, %s899
      %p901 = scmp.lt.s32.totalorder %s42, 1
      %s902 = scalar_select %p901, %s42, 1
      %s903 = smul.addr %s902, 4
      %s904 = smul.addr %s903, 4
      %s905 = scalar_lea.vmem %s4, %s904
      %p906 = scmp.lt.s32.totalorder %s42, 1
      %s907 = scalar_select %p906, %s42, 1
      %s908 = scalar_lea.vmem %s5, %s907
      %p909 = scmp.lt.s32.totalorder %s42, 1
      %s910 = scalar_select %p909, %s42, 1
      %s911 = scalar_lea.vmem %s6, %s910
      %p912 = scmp.lt.s32.totalorder %s42, 1
      %s913 = scalar_select %p912, %s42, 1
      %s914 = scalar_lea.vmem %s7, %s913
      %p915 = scmp.lt.s32.totalorder %s42, 1
      %s916 = scalar_select %p915, %s42, 1
      %s917 = scalar_lea.vmem %s8, %s916
      %p918 = scmp.lt.s32.totalorder %s42, 1
      %s919 = scalar_select %p918, %s42, 1
      %s920 = scalar_lea.vmem %s9, %s919
      %p921 = scmp.lt.s32.totalorder %s42, 1
      %s922 = scalar_select %p921, %s42, 1
      %s923 = smul.addr %s922, 4
      %s924 = smul.addr %s923, 4
      %s925 = scalar_lea.vmem %s10, %s924
      %p926 = scmp.lt.s32.totalorder %s42, 1
      %s927 = scalar_select %p926, %s42, 1
      %s928 = scalar_lea.vmem %s11, %s927
      %p929 = scmp.lt.s32.totalorder %s42, 1
      %s930 = scalar_select %p929, %s42, 1
      %s931 = smul.addr %s930, 8
      %s932 = smul.addr %s931, 4
      %s933 = scalar_lea.vmem %s12, %s932
      %p934 = scmp.lt.s32.totalorder %s42, 1
      %s935 = scalar_select %p934, %s42, 1
      %s936 = scalar_lea.vmem %s13, %s935
      %p937 = scmp.lt.s32.totalorder %s41, 1
      %s938 = scalar_select %p937, %s41, 1
      %s939 = scalar_lea.vmem %s24, %s938
      %p941 = scmp.eq.s32.totalorder %s42, 0
      // Predicated region
      $region117: #{tpu_custom_call.1} parent=115 // pred_check
        %p942 = pneg %p941
      $region118: #{tpu_custom_call.1} parent=115 // pred_check_branch
        %944 = sbr.rel (%p942) target = $region120
      $region119: #{tpu_custom_call.1} parent=115 // pred_region
        %v945 = vld [vmem:[%s891] sm:$0xff]
        %v946 = vmul.f32 %v945, 5.656854
        %v947 = vld [vmem:[%s1] sm:$0xff]
        %v948 = vadd.f32 %v946, %v947
        %vm949 = vcmask 261120
        %950 = vst.msk [vmem:[#allocation2] sm:$0xff] %vm949, %v948
      $region120: #{tpu_custom_call.1} parent=115 // pred_fallthru
        _
      %v951 = vld [vmem:[#allocation2] sm:$0xff]
      %v952 = vpack.c.bf16 %v951, %v951
      %v953 = vld [vmem:[%s896] sm:$0xf]
      %v954 = vld [vmem:[%s896 + $0x4] sm:$0xf]
      %v955 = vld [vmem:[%s896 + $0x8] sm:$0xf]
      %v956 = vld [vmem:[%s896 + $0xc] sm:$0xf]
      %v957 = vld [vmem:[%s896 + $0x10] sm:$0xf]
      %v958 = vld [vmem:[%s896 + $0x14] sm:$0xf]
      %v959 = vld [vmem:[%s896 + $0x18] sm:$0xf]
      %v960 = vld [vmem:[%s896 + $0x1c] sm:$0xf]
      %v961 = vld [vmem:[%s896 + $0x20] sm:$0xf]
      %v962 = vld [vmem:[%s896 + $0x24] sm:$0xf]
      %v963 = vld [vmem:[%s896 + $0x28] sm:$0xf]
      %v964 = vld [vmem:[%s896 + $0x2c] sm:$0xf]
      %v965 = vld [vmem:[%s896 + $0x30] sm:$0xf]
      %v966 = vld [vmem:[%s896 + $0x34] sm:$0xf]
      %v967 = vld [vmem:[%s896 + $0x38] sm:$0xf]
      %v968 = vld [vmem:[%s896 + $0x3c] sm:$0xf]
      %v969 = vld [vmem:[%s900] sm:$0x1]
      %v970 = vld [vmem:[%s900 + $0x1] sm:$0x1]
      %v971 = vld [vmem:[%s900 + $0x2] sm:$0x1]
      %v972 = vld [vmem:[%s900 + $0x3] sm:$0x1]
      %v977 = vlaneseq
      %v978 = vshrl.u32 %v977, 7
      %v979 = vsub.s32 0, %v978
      %v980 = vrot.slane %v969, %v979
      %v981 = vlaneseq
      %v982 = vshrl.u32 %v981, 7
      %v983 = vsub.s32 0, %v982
      %v984 = vrot.slane %v970, %v983
      %v985 = vlaneseq
      %v986 = vshrl.u32 %v985, 7
      %v987 = vsub.s32 0, %v986
      %v988 = vrot.slane %v971, %v987
      %v989 = vlaneseq
      %v990 = vshrl.u32 %v989, 7
      %v991 = vsub.s32 0, %v990
      %v992 = vrot.slane %v972, %v991
      %v1001 = vunpack.c.l.b16 %v953
      %v1002 = vunpack.c.l.b16 %v954
      %v1003 = vunpack.c.l.b16 %v955
      %v1004 = vunpack.c.l.b16 %v956
      %v1005 = vpack.c.b16 %v1002, %v1001
      %v1006 = vpack.c.b16 %v1004, %v1003
      %vm1009 = vcmask 261120
      %v1011 = vsel %vm1009, %v952, 0
      %1013 = vmatprep.subr.bf16.mxu0 0
      %1014 = vmatpush1.bf16.msra.mxu0 0
      %1015 = vmatprep.subr.bf16.mxu0 0
      %1016 = vmatpush1.bf16.msra.mxu0 0
      %1017 = vmatprep.subr.bf16.mxu0 0
      %1018 = vmatpush1.bf16.msra.mxu0 0
      %1019 = vmatprep.subr.bf16.mxu0 0
      %1020 = vmatpush1.bf16.msra.mxu0 0
      %1021 = vmatprep.subr.bf16.mxu0 0
      %1022 = vmatpush1.bf16.msra.mxu0 0
      %1023 = vmatprep.subr.bf16.mxu0 0
      %1024 = vmatpush1.bf16.msra.mxu0 0
      %1025 = vmatprep.subr.bf16.mxu0 0
      %1026 = vmatpush1.bf16.msra.mxu0 %v1006
      %1027 = vmatprep.subr.bf16.mxu0 0
      %1028 = vmatpush1.bf16.msra.mxu0 %v1005
      %1029 = vmatprep.subr.bf16.mxu0 0
      %1030 = vmatpush2.bf16.msra.mxu0 0
      %1031 = vmatprep.subr.bf16.mxu0 0
      %1032 = vmatpush2.bf16.msra.mxu0 0
      %1033 = vmatprep.subr.bf16.mxu0 0
      %1034 = vmatpush2.bf16.msra.mxu0 0
      %1035 = vmatprep.subr.bf16.mxu0 0
      %1036 = vmatpush2.bf16.msra.mxu0 0
      %1037 = vmatprep.subr.bf16.mxu0 0
      %1038 = vmatpush2.bf16.msra.mxu0 0
      %1039 = vmatprep.subr.bf16.mxu0 0
      %1040 = vmatpush2.bf16.msra.mxu0 0
      %1041 = vmatprep.subr.bf16.mxu0 0
      %1042 = vmatpush2.bf16.msra.mxu0 0
      %1043 = vmatprep.subr.bf16.mxu0 0
      %1044 = vmatpush2.bf16.msra.mxu0 0
      %1045 = vmatprep.mubr.bf16.mxu0 0
      %1046 = vmatmul.mubr.bf16.gmra.mxu0 %v1011
      %v1047 = vpop.f32.mrf.mxu0
      %v1048 = vadd.f32 %v980, %v1047
      %v1049 = vpop.f32.mrf.mxu0
      %v1050 = vpop.f32.mrf.mxu0
      %v1051 = vpop.f32.mrf.mxu0
      %1052 = vdwg.mxu0
      %v1057 = vunpack.c.l.b16 %v957
      %v1058 = vunpack.c.l.b16 %v958
      %v1059 = vunpack.c.l.b16 %v959
      %v1060 = vunpack.c.l.b16 %v960
      %v1061 = vpack.c.b16 %v1058, %v1057
      %v1062 = vpack.c.b16 %v1060, %v1059
      %1065 = vmatprep.subr.bf16.mxu0 0
      %1066 = vmatpush1.bf16.msra.mxu0 0
      %1067 = vmatprep.subr.bf16.mxu0 0
      %1068 = vmatpush1.bf16.msra.mxu0 0
      %1069 = vmatprep.subr.bf16.mxu0 0
      %1070 = vmatpush1.bf16.msra.mxu0 0
      %1071 = vmatprep.subr.bf16.mxu0 0
      %1072 = vmatpush1.bf16.msra.mxu0 0
      %1073 = vmatprep.subr.bf16.mxu0 0
      %1074 = vmatpush1.bf16.msra.mxu0 0
      %1075 = vmatprep.subr.bf16.mxu0 0
      %1076 = vmatpush1.bf16.msra.mxu0 0
      %1077 = vmatprep.subr.bf16.mxu0 0
      %1078 = vmatpush1.bf16.msra.mxu0 %v1062
      %1079 = vmatprep.subr.bf16.mxu0 0
      %1080 = vmatpush1.bf16.msra.mxu0 %v1061
      %1081 = vmatprep.subr.bf16.mxu0 0
      %1082 = vmatpush2.bf16.msra.mxu0 0
      %1083 = vmatprep.subr.bf16.mxu0 0
      %1084 = vmatpush2.bf16.msra.mxu0 0
      %1085 = vmatprep.subr.bf16.mxu0 0
      %1086 = vmatpush2.bf16.msra.mxu0 0
      %1087 = vmatprep.subr.bf16.mxu0 0
      %1088 = vmatpush2.bf16.msra.mxu0 0
      %1089 = vmatprep.subr.bf16.mxu0 0
      %1090 = vmatpush2.bf16.msra.mxu0 0
      %1091 = vmatprep.subr.bf16.mxu0 0
      %1092 = vmatpush2.bf16.msra.mxu0 0
      %1093 = vmatprep.subr.bf16.mxu0 0
      %1094 = vmatpush2.bf16.msra.mxu0 0
      %1095 = vmatprep.subr.bf16.mxu0 0
      %1096 = vmatpush2.bf16.msra.mxu0 0
      %1097 = vmatprep.mubr.bf16.mxu0 0
      %1098 = vmatmul.mubr.bf16.gmra.mxu0 %v1011
      %v1099 = vpop.f32.mrf.mxu0
      %v1100 = vadd.f32 %v984, %v1099
      %v1101 = vpop.f32.mrf.mxu0
      %v1102 = vpop.f32.mrf.mxu0
      %v1103 = vpop.f32.mrf.mxu0
      %1104 = vdwg.mxu0
      %v1109 = vunpack.c.l.b16 %v961
      %v1110 = vunpack.c.l.b16 %v962
      %v1111 = vunpack.c.l.b16 %v963
      %v1112 = vunpack.c.l.b16 %v964
      %v1113 = vpack.c.b16 %v1110, %v1109
      %v1114 = vpack.c.b16 %v1112, %v1111
      %1117 = vmatprep.subr.bf16.mxu0 0
      %1118 = vmatpush1.bf16.msra.mxu0 0
      %1119 = vmatprep.subr.bf16.mxu0 0
      %1120 = vmatpush1.bf16.msra.mxu0 0
      %1121 = vmatprep.subr.bf16.mxu0 0
      %1122 = vmatpush1.bf16.msra.mxu0 0
      %1123 = vmatprep.subr.bf16.mxu0 0
      %1124 = vmatpush1.bf16.msra.mxu0 0
      %1125 = vmatprep.subr.bf16.mxu0 0
      %1126 = vmatpush1.bf16.msra.mxu0 0
      %1127 = vmatprep.subr.bf16.mxu0 0
      %1128 = vmatpush1.bf16.msra.mxu0 0
      %1129 = vmatprep.subr.bf16.mxu0 0
      %1130 = vmatpush1.bf16.msra.mxu0 %v1114
      %1131 = vmatprep.subr.bf16.mxu0 0
      %1132 = vmatpush1.bf16.msra.mxu0 %v1113
      %1133 = vmatprep.subr.bf16.mxu0 0
      %1134 = vmatpush2.bf16.msra.mxu0 0
      %1135 = vmatprep.subr.bf16.mxu0 0
      %1136 = vmatpush2.bf16.msra.mxu0 0
      %1137 = vmatprep.subr.bf16.mxu0 0
      %1138 = vmatpush2.bf16.msra.mxu0 0
      %1139 = vmatprep.subr.bf16.mxu0 0
      %1140 = vmatpush2.bf16.msra.mxu0 0
      %1141 = vmatprep.subr.bf16.mxu0 0
      %1142 = vmatpush2.bf16.msra.mxu0 0
      %1143 = vmatprep.subr.bf16.mxu0 0
      %1144 = vmatpush2.bf16.msra.mxu0 0
      %1145 = vmatprep.subr.bf16.mxu0 0
      %1146 = vmatpush2.bf16.msra.mxu0 0
      %1147 = vmatprep.subr.bf16.mxu0 0
      %1148 = vmatpush2.bf16.msra.mxu0 0
      %1149 = vmatprep.mubr.bf16.mxu0 0
      %1150 = vmatmul.mubr.bf16.gmra.mxu0 %v1011
      %v1151 = vpop.f32.mrf.mxu0
      %v1152 = vadd.f32 %v988, %v1151
      %v1153 = vpop.f32.mrf.mxu0
      %v1154 = vpop.f32.mrf.mxu0
      %v1155 = vpop.f32.mrf.mxu0
      %1156 = vdwg.mxu0
      %v1161 = vunpack.c.l.b16 %v965
      %v1162 = vunpack.c.l.b16 %v966
      %v1163 = vunpack.c.l.b16 %v967
      %v1164 = vunpack.c.l.b16 %v968
      %v1165 = vpack.c.b16 %v1162, %v1161
      %v1166 = vpack.c.b16 %v1164, %v1163
      %1169 = vmatprep.subr.bf16.mxu0 0
      %1170 = vmatpush1.bf16.msra.mxu0 0
      %1171 = vmatprep.subr.bf16.mxu0 0
      %1172 = vmatpush1.bf16.msra.mxu0 0
      %1173 = vmatprep.subr.bf16.mxu0 0
      %1174 = vmatpush1.bf16.msra.mxu0 0
      %1175 = vmatprep.subr.bf16.mxu0 0
      %1176 = vmatpush1.bf16.msra.mxu0 0
      %1177 = vmatprep.subr.bf16.mxu0 0
      %1178 = vmatpush1.bf16.msra.mxu0 0
      %1179 = vmatprep.subr.bf16.mxu0 0
      %1180 = vmatpush1.bf16.msra.mxu0 0
      %1181 = vmatprep.subr.bf16.mxu0 0
      %1182 = vmatpush1.bf16.msra.mxu0 %v1166
      %1183 = vmatprep.subr.bf16.mxu0 0
      %1184 = vmatpush1.bf16.msra.mxu0 %v1165
      %1185 = vmatprep.subr.bf16.mxu0 0
      %1186 = vmatpush2.bf16.msra.mxu0 0
      %1187 = vmatprep.subr.bf16.mxu0 0
      %1188 = vmatpush2.bf16.msra.mxu0 0
      %1189 = vmatprep.subr.bf16.mxu0 0
      %1190 = vmatpush2.bf16.msra.mxu0 0
      %1191 = vmatprep.subr.bf16.mxu0 0
      %1192 = vmatpush2.bf16.msra.mxu0 0
      %1193 = vmatprep.subr.bf16.mxu0 0
      %1194 = vmatpush2.bf16.msra.mxu0 0
      %1195 = vmatprep.subr.bf16.mxu0 0
      %1196 = vmatpush2.bf16.msra.mxu0 0
      %1197 = vmatprep.subr.bf16.mxu0 0
      %1198 = vmatpush2.bf16.msra.mxu0 0
      %1199 = vmatprep.subr.bf16.mxu0 0
      %1200 = vmatpush2.bf16.msra.mxu0 0
      %1201 = vmatprep.mubr.bf16.mxu0 0
      %1202 = vmatmul.mubr.bf16.gmra.mxu0 %v1011
      %v1203 = vpop.f32.mrf.mxu0
      %v1204 = vadd.f32 %v992, %v1203
      %v1205 = vpop.f32.mrf.mxu0
      %v1206 = vpop.f32.mrf.mxu0
      %v1207 = vpop.f32.mrf.mxu0
      %1208 = vdwg.mxu0
      %v1209 = vpack.c.bf16 %v1048, %v1048
      %v1210 = vpack.c.bf16 %v1100, %v1100
      %v1211 = vpack.c.bf16 %v1152, %v1152
      %v1212 = vpack.c.bf16 %v1204, %v1204
      %1214 = vrot.lane.b32.xlu0 %v1209, 120
      %v1215 = vpop.permute.xlu0 %1214
      %vm1216 = vcmask 64512
      %v1218 = vsel %vm1216, %v1209, 0
      %v1221 = vsel %vm1216, %v1215, 0
      %1223 = vmatprep.subr.bf16.mxu0 0
      %1224 = vmatpush1.bf16.xpose.msra.mxu0 0
      %1225 = vmatprep.subr.bf16.mxu0 0
      %1226 = vmatpush1.bf16.xpose.msra.mxu0 0
      %1227 = vmatprep.subr.bf16.mxu0 0
      %1228 = vmatpush1.bf16.xpose.msra.mxu0 0
      %1229 = vmatprep.subr.bf16.mxu0 0
      %1230 = vmatpush1.bf16.xpose.msra.mxu0 0
      %1231 = vmatprep.subr.bf16.mxu0 0
      %1232 = vmatpush1.bf16.xpose.msra.mxu0 0
      %1233 = vmatprep.subr.bf16.mxu0 0
      %1234 = vmatpush1.bf16.xpose.msra.mxu0 0
      %1235 = vmatprep.subr.bf16.mxu0 0
      %1236 = vmatpush1.bf16.xpose.msra.mxu0 0
      %1237 = vmatprep.subr.bf16.mxu0 0
      %1238 = vmatpush1.bf16.xpose.msra.mxu0 %v1221
      %1239 = vmatprep.subr.bf16.mxu0 0
      %1240 = vmatpush2.bf16.xpose.msra.mxu0 0
      %1241 = vmatprep.subr.bf16.mxu0 0
      %1242 = vmatpush2.bf16.xpose.msra.mxu0 0
      %1243 = vmatprep.subr.bf16.mxu0 0
      %1244 = vmatpush2.bf16.xpose.msra.mxu0 0
      %1245 = vmatprep.subr.bf16.mxu0 0
      %1246 = vmatpush2.bf16.xpose.msra.mxu0 0
      %1247 = vmatprep.subr.bf16.mxu0 0
      %1248 = vmatpush2.bf16.xpose.msra.mxu0 0
      %1249 = vmatprep.subr.bf16.mxu0 0
      %1250 = vmatpush2.bf16.xpose.msra.mxu0 0
      %1251 = vmatprep.subr.bf16.mxu0 0
      %1252 = vmatpush2.bf16.xpose.msra.mxu0 0
      %1253 = vmatprep.subr.bf16.mxu0 0
      %1254 = vmatpush2.bf16.xpose.msra.mxu0 0
      %1255 = vmatprep.mubr.bf16.mxu0 0
      %1256 = vmatmul.mubr.bf16.gmra.mxu0 %v1218
      %v1257 = vpop.f32.mrf.mxu0
      %v1258 = vadd.f32 0.0, %v1257
      %v1259 = vpop.f32.mrf.mxu0
      %v1260 = vpop.f32.mrf.mxu0
      %v1261 = vpop.f32.mrf.mxu0
      %1262 = vdwg.mxu0
      %1264 = vrot.lane.b32.xlu0 %v1210, 120
      %v1265 = vpop.permute.xlu0 %1264
      %v1267 = vsel %vm1216, %v1210, 0
      %v1270 = vsel %vm1216, %v1265, 0
      %1272 = vmatprep.subr.bf16.mxu0 0
      %1273 = vmatpush1.bf16.xpose.msra.mxu0 0
      %1274 = vmatprep.subr.bf16.mxu0 0
      %1275 = vmatpush1.bf16.xpose.msra.mxu0 0
      %1276 = vmatprep.subr.bf16.mxu0 0
      %1277 = vmatpush1.bf16.xpose.msra.mxu0 0
      %1278 = vmatprep.subr.bf16.mxu0 0
      %1279 = vmatpush1.bf16.xpose.msra.mxu0 0
      %1280 = vmatprep.subr.bf16.mxu0 0
      %1281 = vmatpush1.bf16.xpose.msra.mxu0 0
      %1282 = vmatprep.subr.bf16.mxu0 0
      %1283 = vmatpush1.bf16.xpose.msra.mxu0 0
      %1284 = vmatprep.subr.bf16.mxu0 0
      %1285 = vmatpush1.bf16.xpose.msra.mxu0 0
      %1286 = vmatprep.subr.bf16.mxu0 0
      %1287 = vmatpush1.bf16.xpose.msra.mxu0 %v1270
      %1288 = vmatprep.subr.bf16.mxu0 0
      %1289 = vmatpush2.bf16.xpose.msra.mxu0 0
      %1290 = vmatprep.subr.bf16.mxu0 0
      %1291 = vmatpush2.bf16.xpose.msra.mxu0 0
      %1292 = vmatprep.subr.bf16.mxu0 0
      %1293 = vmatpush2.bf16.xpose.msra.mxu0 0
      %1294 = vmatprep.subr.bf16.mxu0 0
      %1295 = vmatpush2.bf16.xpose.msra.mxu0 0
      %1296 = vmatprep.subr.bf16.mxu0 0
      %1297 = vmatpush2.bf16.xpose.msra.mxu0 0
      %1298 = vmatprep.subr.bf16.mxu0 0
      %1299 = vmatpush2.bf16.xpose.msra.mxu0 0
      %1300 = vmatprep.subr.bf16.mxu0 0
      %1301 = vmatpush2.bf16.xpose.msra.mxu0 0
      %1302 = vmatprep.subr.bf16.mxu0 0
      %1303 = vmatpush2.bf16.xpose.msra.mxu0 0
      %1304 = vmatprep.mubr.bf16.mxu0 0
      %1305 = vmatmul.mubr.bf16.gmra.mxu0 %v1267
      %v1306 = vpop.f32.mrf.mxu0
      %v1307 = vadd.f32 0.0, %v1306
      %v1308 = vpop.f32.mrf.mxu0
      %v1309 = vpop.f32.mrf.mxu0
      %v1310 = vpop.f32.mrf.mxu0
      %1311 = vdwg.mxu0
      %1313 = vrot.lane.b32.xlu0 %v1211, 120
      %v1314 = vpop.permute.xlu0 %1313
      %v1316 = vsel %vm1216, %v1211, 0
      %v1319 = vsel %vm1216, %v1314, 0
      %1321 = vmatprep.subr.bf16.mxu0 0
      %1322 = vmatpush1.bf16.xpose.msra.mxu0 0
      %1323 = vmatprep.subr.bf16.mxu0 0
      %1324 = vmatpush1.bf16.xpose.msra.mxu0 0
      %1325 = vmatprep.subr.bf16.mxu0 0
      %1326 = vmatpush1.bf16.xpose.msra.mxu0 0
      %1327 = vmatprep.subr.bf16.mxu0 0
      %1328 = vmatpush1.bf16.xpose.msra.mxu0 0
      %1329 = vmatprep.subr.bf16.mxu0 0
      %1330 = vmatpush1.bf16.xpose.msra.mxu0 0
      %1331 = vmatprep.subr.bf16.mxu0 0
      %1332 = vmatpush1.bf16.xpose.msra.mxu0 0
      %1333 = vmatprep.subr.bf16.mxu0 0
      %1334 = vmatpush1.bf16.xpose.msra.mxu0 0
      %1335 = vmatprep.subr.bf16.mxu0 0
      %1336 = vmatpush1.bf16.xpose.msra.mxu0 %v1319
      %1337 = vmatprep.subr.bf16.mxu0 0
      %1338 = vmatpush2.bf16.xpose.msra.mxu0 0
      %1339 = vmatprep.subr.bf16.mxu0 0
      %1340 = vmatpush2.bf16.xpose.msra.mxu0 0
      %1341 = vmatprep.subr.bf16.mxu0 0
      %1342 = vmatpush2.bf16.xpose.msra.mxu0 0
      %1343 = vmatprep.subr.bf16.mxu0 0
      %1344 = vmatpush2.bf16.xpose.msra.mxu0 0
      %1345 = vmatprep.subr.bf16.mxu0 0
      %1346 = vmatpush2.bf16.xpose.msra.mxu0 0
      %1347 = vmatprep.subr.bf16.mxu0 0
      %1348 = vmatpush2.bf16.xpose.msra.mxu0 0
      %1349 = vmatprep.subr.bf16.mxu0 0
      %1350 = vmatpush2.bf16.xpose.msra.mxu0 0
      %1351 = vmatprep.subr.bf16.mxu0 0
      %1352 = vmatpush2.bf16.xpose.msra.mxu0 0
      %1353 = vmatprep.mubr.bf16.mxu0 0
      %1354 = vmatmul.mubr.bf16.gmra.mxu0 %v1316
      %v1355 = vpop.f32.mrf.mxu0
      %v1356 = vadd.f32 0.0, %v1355
      %v1357 = vpop.f32.mrf.mxu0
      %v1358 = vpop.f32.mrf.mxu0
      %v1359 = vpop.f32.mrf.mxu0
      %1360 = vdwg.mxu0
      %1362 = vrot.lane.b32.xlu0 %v1212, 120
      %v1363 = vpop.permute.xlu0 %1362
      %v1365 = vsel %vm1216, %v1212, 0
      %v1368 = vsel %vm1216, %v1363, 0
      %1370 = vmatprep.subr.bf16.mxu0 0
      %1371 = vmatpush1.bf16.xpose.msra.mxu0 0
      %1372 = vmatprep.subr.bf16.mxu0 0
      %1373 = vmatpush1.bf16.xpose.msra.mxu0 0
      %1374 = vmatprep.subr.bf16.mxu0 0
      %1375 = vmatpush1.bf16.xpose.msra.mxu0 0
      %1376 = vmatprep.subr.bf16.mxu0 0
      %1377 = vmatpush1.bf16.xpose.msra.mxu0 0
      %1378 = vmatprep.subr.bf16.mxu0 0
      %1379 = vmatpush1.bf16.xpose.msra.mxu0 0
      %1380 = vmatprep.subr.bf16.mxu0 0
      %1381 = vmatpush1.bf16.xpose.msra.mxu0 0
      %1382 = vmatprep.subr.bf16.mxu0 0
      %1383 = vmatpush1.bf16.xpose.msra.mxu0 0
      %1384 = vmatprep.subr.bf16.mxu0 0
      %1385 = vmatpush1.bf16.xpose.msra.mxu0 %v1368
      %1386 = vmatprep.subr.bf16.mxu0 0
      %1387 = vmatpush2.bf16.xpose.msra.mxu0 0
      %1388 = vmatprep.subr.bf16.mxu0 0
      %1389 = vmatpush2.bf16.xpose.msra.mxu0 0
      %1390 = vmatprep.subr.bf16.mxu0 0
      %1391 = vmatpush2.bf16.xpose.msra.mxu0 0
      %1392 = vmatprep.subr.bf16.mxu0 0
      %1393 = vmatpush2.bf16.xpose.msra.mxu0 0
      %1394 = vmatprep.subr.bf16.mxu0 0
      %1395 = vmatpush2.bf16.xpose.msra.mxu0 0
      %1396 = vmatprep.subr.bf16.mxu0 0
      %1397 = vmatpush2.bf16.xpose.msra.mxu0 0
      %1398 = vmatprep.subr.bf16.mxu0 0
      %1399 = vmatpush2.bf16.xpose.msra.mxu0 0
      %1400 = vmatprep.subr.bf16.mxu0 0
      %1401 = vmatpush2.bf16.xpose.msra.mxu0 0
      %1402 = vmatprep.mubr.bf16.mxu0 0
      %1403 = vmatmul.mubr.bf16.gmra.mxu0 %v1365
      %v1404 = vpop.f32.mrf.mxu0
      %v1405 = vadd.f32 0.0, %v1404
      %v1406 = vpop.f32.mrf.mxu0
      %v1407 = vpop.f32.mrf.mxu0
      %v1408 = vpop.f32.mrf.mxu0
      %1409 = vdwg.mxu0
      %v1410 = vsel %vm1216, %v1258, -inf
      %1411 = vmax.xlane.f32.xlu0 %v1410
      %v1412 = vpop.xlane.xlu0 %1411
      %v1413 = vsel %vm1216, %v1307, -inf
      %1414 = vmax.xlane.f32.xlu0 %v1413
      %v1415 = vpop.xlane.xlu0 %1414
      %v1416 = vsel %vm1216, %v1356, -inf
      %1417 = vmax.xlane.f32.xlu0 %v1416
      %v1418 = vpop.xlane.xlu0 %1417
      %v1419 = vsel %vm1216, %v1405, -inf
      %1420 = vmax.xlane.f32.xlu0 %v1419
      %v1421 = vpop.xlane.xlu0 %1420
      %v1422 = vsub.f32 %v1258, %v1412
      %v1423 = vsub.f32 %v1307, %v1415
      %v1424 = vsub.f32 %v1356, %v1418
      %v1425 = vsub.f32 %v1405, %v1421
      %v1426 = vmul.f32 %v1422, 1.442695
      %v1427 = vpow.pop %v1426
      %v1428 = vmul.f32 %v1423, 1.442695
      %v1429 = vpow.pop %v1428
      %v1430 = vmul.f32 %v1424, 1.442695
      %v1431 = vpow.pop %v1430
      %v1432 = vmul.f32 %v1425, 1.442695
      %v1433 = vpow.pop %v1432
      %v1434 = vsel %vm1216, %v1427, 0.0
      %1435 = vadd.xlane.f32.xlu0 %v1434
      %v1436 = vpop.xlane.xlu0 %1435
      %v1437 = vsel %vm1216, %v1429, 0.0
      %1438 = vadd.xlane.f32.xlu0 %v1437
      %v1439 = vpop.xlane.xlu0 %1438
      %v1440 = vsel %vm1216, %v1431, 0.0
      %1441 = vadd.xlane.f32.xlu0 %v1440
      %v1442 = vpop.xlane.xlu0 %1441
      %v1443 = vsel %vm1216, %v1433, 0.0
      %1444 = vadd.xlane.f32.xlu0 %v1443
      %v1445 = vpop.xlane.xlu0 %1444
      %v1446 = vrcp.pop %v1436
      %v1447 = vrcp.pop %v1439
      %v1448 = vrcp.pop %v1442
      %v1449 = vrcp.pop %v1445
      %v1450 = vmul.f32 %v1427, %v1446
      %v1451 = vmul.f32 %v1429, %v1447
      %v1452 = vmul.f32 %v1431, %v1448
      %v1453 = vmul.f32 %v1433, %v1449
      %v1454 = vpack.c.bf16 %v1450, %v1450
      %v1455 = vpack.c.bf16 %v1451, %v1451
      %v1456 = vpack.c.bf16 %v1452, %v1452
      %v1457 = vpack.c.bf16 %v1453, %v1453
      %1458 = vrot.lane.b32.xlu0 %v1209, 112
      %v1459 = vpop.permute.xlu0 %1458
      %v1461 = vsel %vm1216, %v1454, 0
      %vm1463 = vcmask 1043456
      %v1465 = vsel %vm1463, %v1459, 0
      %1467 = vmatprep.subr.bf16.mxu0 0
      %1468 = vmatpush1.bf16.msra.mxu0 0
      %1469 = vmatprep.subr.bf16.mxu0 0
      %1470 = vmatpush1.bf16.msra.mxu0 0
      %1471 = vmatprep.subr.bf16.mxu0 0
      %1472 = vmatpush1.bf16.msra.mxu0 0
      %1473 = vmatprep.subr.bf16.mxu0 0
      %1474 = vmatpush1.bf16.msra.mxu0 0
      %1475 = vmatprep.subr.bf16.mxu0 0
      %1476 = vmatpush1.bf16.msra.mxu0 0
      %1477 = vmatprep.subr.bf16.mxu0 0
      %1478 = vmatpush1.bf16.msra.mxu0 0
      %1479 = vmatprep.subr.bf16.mxu0 0
      %1480 = vmatpush1.bf16.msra.mxu0 0
      %1481 = vmatprep.subr.bf16.mxu0 0
      %1482 = vmatpush1.bf16.msra.mxu0 %v1465
      %1483 = vmatprep.subr.bf16.mxu0 0
      %1484 = vmatpush2.bf16.msra.mxu0 0
      %1485 = vmatprep.subr.bf16.mxu0 0
      %1486 = vmatpush2.bf16.msra.mxu0 0
      %1487 = vmatprep.subr.bf16.mxu0 0
      %1488 = vmatpush2.bf16.msra.mxu0 0
      %1489 = vmatprep.subr.bf16.mxu0 0
      %1490 = vmatpush2.bf16.msra.mxu0 0
      %1491 = vmatprep.subr.bf16.mxu0 0
      %1492 = vmatpush2.bf16.msra.mxu0 0
      %1493 = vmatprep.subr.bf16.mxu0 0
      %1494 = vmatpush2.bf16.msra.mxu0 0
      %1495 = vmatprep.subr.bf16.mxu0 0
      %1496 = vmatpush2.bf16.msra.mxu0 0
      %1497 = vmatprep.subr.bf16.mxu0 0
      %1498 = vmatpush2.bf16.msra.mxu0 0
      %1499 = vmatprep.mubr.bf16.mxu0 0
      %1500 = vmatmul.mubr.bf16.gmra.mxu0 %v1461
      %v1501 = vpop.f32.mrf.mxu0
      %v1502 = vadd.f32 0.0, %v1501
      %v1503 = vpop.f32.mrf.mxu0
      %v1504 = vpop.f32.mrf.mxu0
      %v1505 = vpop.f32.mrf.mxu0
      %1506 = vdwg.mxu0
      %1507 = vrot.lane.b32.xlu0 %v1210, 112
      %v1508 = vpop.permute.xlu0 %1507
      %v1510 = vsel %vm1216, %v1455, 0
      %v1513 = vsel %vm1463, %v1508, 0
      %1515 = vmatprep.subr.bf16.mxu0 0
      %1516 = vmatpush1.bf16.msra.mxu0 0
      %1517 = vmatprep.subr.bf16.mxu0 0
      %1518 = vmatpush1.bf16.msra.mxu0 0
      %1519 = vmatprep.subr.bf16.mxu0 0
      %1520 = vmatpush1.bf16.msra.mxu0 0
      %1521 = vmatprep.subr.bf16.mxu0 0
      %1522 = vmatpush1.bf16.msra.mxu0 0
      %1523 = vmatprep.subr.bf16.mxu0 0
      %1524 = vmatpush1.bf16.msra.mxu0 0
      %1525 = vmatprep.subr.bf16.mxu0 0
      %1526 = vmatpush1.bf16.msra.mxu0 0
      %1527 = vmatprep.subr.bf16.mxu0 0
      %1528 = vmatpush1.bf16.msra.mxu0 0
      %1529 = vmatprep.subr.bf16.mxu0 0
      %1530 = vmatpush1.bf16.msra.mxu0 %v1513
      %1531 = vmatprep.subr.bf16.mxu0 0
      %1532 = vmatpush2.bf16.msra.mxu0 0
      %1533 = vmatprep.subr.bf16.mxu0 0
      %1534 = vmatpush2.bf16.msra.mxu0 0
      %1535 = vmatprep.subr.bf16.mxu0 0
      %1536 = vmatpush2.bf16.msra.mxu0 0
      %1537 = vmatprep.subr.bf16.mxu0 0
      %1538 = vmatpush2.bf16.msra.mxu0 0
      %1539 = vmatprep.subr.bf16.mxu0 0
      %1540 = vmatpush2.bf16.msra.mxu0 0
      %1541 = vmatprep.subr.bf16.mxu0 0
      %1542 = vmatpush2.bf16.msra.mxu0 0
      %1543 = vmatprep.subr.bf16.mxu0 0
      %1544 = vmatpush2.bf16.msra.mxu0 0
      %1545 = vmatprep.subr.bf16.mxu0 0
      %1546 = vmatpush2.bf16.msra.mxu0 0
      %1547 = vmatprep.mubr.bf16.mxu0 0
      %1548 = vmatmul.mubr.bf16.gmra.mxu0 %v1510
      %v1549 = vpop.f32.mrf.mxu0
      %v1550 = vadd.f32 0.0, %v1549
      %v1551 = vpop.f32.mrf.mxu0
      %v1552 = vpop.f32.mrf.mxu0
      %v1553 = vpop.f32.mrf.mxu0
      %1554 = vdwg.mxu0
      %1555 = vrot.lane.b32.xlu0 %v1211, 112
      %v1556 = vpop.permute.xlu0 %1555
      %v1558 = vsel %vm1216, %v1456, 0
      %v1561 = vsel %vm1463, %v1556, 0
      %1563 = vmatprep.subr.bf16.mxu0 0
      %1564 = vmatpush1.bf16.msra.mxu0 0
      %1565 = vmatprep.subr.bf16.mxu0 0
      %1566 = vmatpush1.bf16.msra.mxu0 0
      %1567 = vmatprep.subr.bf16.mxu0 0
      %1568 = vmatpush1.bf16.msra.mxu0 0
      %1569 = vmatprep.subr.bf16.mxu0 0
      %1570 = vmatpush1.bf16.msra.mxu0 0
      %1571 = vmatprep.subr.bf16.mxu0 0
      %1572 = vmatpush1.bf16.msra.mxu0 0
      %1573 = vmatprep.subr.bf16.mxu0 0
      %1574 = vmatpush1.bf16.msra.mxu0 0
      %1575 = vmatprep.subr.bf16.mxu0 0
      %1576 = vmatpush1.bf16.msra.mxu0 0
      %1577 = vmatprep.subr.bf16.mxu0 0
      %1578 = vmatpush1.bf16.msra.mxu0 %v1561
      %1579 = vmatprep.subr.bf16.mxu0 0
      %1580 = vmatpush2.bf16.msra.mxu0 0
      %1581 = vmatprep.subr.bf16.mxu0 0
      %1582 = vmatpush2.bf16.msra.mxu0 0
      %1583 = vmatprep.subr.bf16.mxu0 0
      %1584 = vmatpush2.bf16.msra.mxu0 0
      %1585 = vmatprep.subr.bf16.mxu0 0
      %1586 = vmatpush2.bf16.msra.mxu0 0
      %1587 = vmatprep.subr.bf16.mxu0 0
      %1588 = vmatpush2.bf16.msra.mxu0 0
      %1589 = vmatprep.subr.bf16.mxu0 0
      %1590 = vmatpush2.bf16.msra.mxu0 0
      %1591 = vmatprep.subr.bf16.mxu0 0
      %1592 = vmatpush2.bf16.msra.mxu0 0
      %1593 = vmatprep.subr.bf16.mxu0 0
      %1594 = vmatpush2.bf16.msra.mxu0 0
      %1595 = vmatprep.mubr.bf16.mxu0 0
      %1596 = vmatmul.mubr.bf16.gmra.mxu0 %v1558
      %v1597 = vpop.f32.mrf.mxu0
      %v1598 = vadd.f32 0.0, %v1597
      %v1599 = vpop.f32.mrf.mxu0
      %v1600 = vpop.f32.mrf.mxu0
      %v1601 = vpop.f32.mrf.mxu0
      %1602 = vdwg.mxu0
      %1603 = vrot.lane.b32.xlu0 %v1212, 112
      %v1604 = vpop.permute.xlu0 %1603
      %v1606 = vsel %vm1216, %v1457, 0
      %v1609 = vsel %vm1463, %v1604, 0
      %1611 = vmatprep.subr.bf16.mxu0 0
      %1612 = vmatpush1.bf16.msra.mxu0 0
      %1613 = vmatprep.subr.bf16.mxu0 0
      %1614 = vmatpush1.bf16.msra.mxu0 0
      %1615 = vmatprep.subr.bf16.mxu0 0
      %1616 = vmatpush1.bf16.msra.mxu0 0
      %1617 = vmatprep.subr.bf16.mxu0 0
      %1618 = vmatpush1.bf16.msra.mxu0 0
      %1619 = vmatprep.subr.bf16.mxu0 0
      %1620 = vmatpush1.bf16.msra.mxu0 0
      %1621 = vmatprep.subr.bf16.mxu0 0
      %1622 = vmatpush1.bf16.msra.mxu0 0
      %1623 = vmatprep.subr.bf16.mxu0 0
      %1624 = vmatpush1.bf16.msra.mxu0 0
      %1625 = vmatprep.subr.bf16.mxu0 0
      %1626 = vmatpush1.bf16.msra.mxu0 %v1609
      %1627 = vmatprep.subr.bf16.mxu0 0
      %1628 = vmatpush2.bf16.msra.mxu0 0
      %1629 = vmatprep.subr.bf16.mxu0 0
      %1630 = vmatpush2.bf16.msra.mxu0 0
      %1631 = vmatprep.subr.bf16.mxu0 0
      %1632 = vmatpush2.bf16.msra.mxu0 0
      %1633 = vmatprep.subr.bf16.mxu0 0
      %1634 = vmatpush2.bf16.msra.mxu0 0
      %1635 = vmatprep.subr.bf16.mxu0 0
      %1636 = vmatpush2.bf16.msra.mxu0 0
      %1637 = vmatprep.subr.bf16.mxu0 0
      %1638 = vmatpush2.bf16.msra.mxu0 0
      %1639 = vmatprep.subr.bf16.mxu0 0
      %1640 = vmatpush2.bf16.msra.mxu0 0
      %1641 = vmatprep.subr.bf16.mxu0 0
      %1642 = vmatpush2.bf16.msra.mxu0 0
      %1643 = vmatprep.mubr.bf16.mxu0 0
      %1644 = vmatmul.mubr.bf16.gmra.mxu0 %v1606
      %v1645 = vpop.f32.mrf.mxu0
      %v1646 = vadd.f32 0.0, %v1645
      %v1647 = vpop.f32.mrf.mxu0
      %v1648 = vpop.f32.mrf.mxu0
      %v1649 = vpop.f32.mrf.mxu0
      %1650 = vdwg.mxu0
      %v1651 = vpack.c.bf16 %v1502, %v1502
      %v1652 = vpack.c.bf16 %v1550, %v1550
      %v1653 = vpack.c.bf16 %v1598, %v1598
      %v1654 = vpack.c.bf16 %v1646, %v1646
      %v1655 = vld [vmem:[%s905] sm:$0xf]
      %v1656 = vld [vmem:[%s905 + $0x4] sm:$0xf]
      %v1657 = vld [vmem:[%s905 + $0x8] sm:$0xf]
      %v1658 = vld [vmem:[%s905 + $0xc] sm:$0xf]
      %v1660 = vsel %vm1216, %v1651, 0
      %v1663 = vsel %vm1463, %v1655, 0
      %1665 = vmatprep.subr.bf16.mxu0 0
      %1666 = vmatpush1.bf16.msra.mxu0 0
      %1667 = vmatprep.subr.bf16.mxu0 0
      %1668 = vmatpush1.bf16.msra.mxu0 0
      %1669 = vmatprep.subr.bf16.mxu0 0
      %1670 = vmatpush1.bf16.msra.mxu0 0
      %1671 = vmatprep.subr.bf16.mxu0 0
      %1672 = vmatpush1.bf16.msra.mxu0 0
      %1673 = vmatprep.subr.bf16.mxu0 0
      %1674 = vmatpush1.bf16.msra.mxu0 0
      %1675 = vmatprep.subr.bf16.mxu0 0
      %1676 = vmatpush1.bf16.msra.mxu0 0
      %1677 = vmatprep.subr.bf16.mxu0 0
      %1678 = vmatpush1.bf16.msra.mxu0 0
      %1679 = vmatprep.subr.bf16.mxu0 0
      %1680 = vmatpush1.bf16.msra.mxu0 %v1663
      %1681 = vmatprep.subr.bf16.mxu0 0
      %1682 = vmatpush2.bf16.msra.mxu0 0
      %1683 = vmatprep.subr.bf16.mxu0 0
      %1684 = vmatpush2.bf16.msra.mxu0 0
      %1685 = vmatprep.subr.bf16.mxu0 0
      %1686 = vmatpush2.bf16.msra.mxu0 0
      %1687 = vmatprep.subr.bf16.mxu0 0
      %1688 = vmatpush2.bf16.msra.mxu0 0
      %1689 = vmatprep.subr.bf16.mxu0 0
      %1690 = vmatpush2.bf16.msra.mxu0 0
      %1691 = vmatprep.subr.bf16.mxu0 0
      %1692 = vmatpush2.bf16.msra.mxu0 0
      %1693 = vmatprep.subr.bf16.mxu0 0
      %1694 = vmatpush2.bf16.msra.mxu0 0
      %1695 = vmatprep.subr.bf16.mxu0 0
      %1696 = vmatpush2.bf16.msra.mxu0 0
      %1697 = vmatprep.mubr.bf16.mxu0 0
      %1698 = vmatmul.mubr.bf16.gmra.mxu0 %v1660
      %v1699 = vpop.f32.mrf.mxu0
      %v1700 = vadd.f32 0.0, %v1699
      %v1701 = vpop.f32.mrf.mxu0
      %v1702 = vpop.f32.mrf.mxu0
      %v1703 = vpop.f32.mrf.mxu0
      %1704 = vdwg.mxu0
      %v1706 = vsel %vm1216, %v1652, 0
      %v1709 = vsel %vm1463, %v1656, 0
      %1711 = vmatprep.subr.bf16.mxu0 0
      %1712 = vmatpush1.bf16.msra.mxu0 0
      %1713 = vmatprep.subr.bf16.mxu0 0
      %1714 = vmatpush1.bf16.msra.mxu0 0
      %1715 = vmatprep.subr.bf16.mxu0 0
      %1716 = vmatpush1.bf16.msra.mxu0 0
      %1717 = vmatprep.subr.bf16.mxu0 0
      %1718 = vmatpush1.bf16.msra.mxu0 0
      %1719 = vmatprep.subr.bf16.mxu0 0
      %1720 = vmatpush1.bf16.msra.mxu0 0
      %1721 = vmatprep.subr.bf16.mxu0 0
      %1722 = vmatpush1.bf16.msra.mxu0 0
      %1723 = vmatprep.subr.bf16.mxu0 0
      %1724 = vmatpush1.bf16.msra.mxu0 0
      %1725 = vmatprep.subr.bf16.mxu0 0
      %1726 = vmatpush1.bf16.msra.mxu0 %v1709
      %1727 = vmatprep.subr.bf16.mxu0 0
      %1728 = vmatpush2.bf16.msra.mxu0 0
      %1729 = vmatprep.subr.bf16.mxu0 0
      %1730 = vmatpush2.bf16.msra.mxu0 0
      %1731 = vmatprep.subr.bf16.mxu0 0
      %1732 = vmatpush2.bf16.msra.mxu0 0
      %1733 = vmatprep.subr.bf16.mxu0 0
      %1734 = vmatpush2.bf16.msra.mxu0 0
      %1735 = vmatprep.subr.bf16.mxu0 0
      %1736 = vmatpush2.bf16.msra.mxu0 0
      %1737 = vmatprep.subr.bf16.mxu0 0
      %1738 = vmatpush2.bf16.msra.mxu0 0
      %1739 = vmatprep.subr.bf16.mxu0 0
      %1740 = vmatpush2.bf16.msra.mxu0 0
      %1741 = vmatprep.subr.bf16.mxu0 0
      %1742 = vmatpush2.bf16.msra.mxu0 0
      %1743 = vmatprep.mubr.bf16.mxu0 0
      %1744 = vmatmul.mubr.bf16.gmra.mxu0 %v1706
      %v1745 = vpop.f32.mrf.mxu0
      %v1746 = vadd.f32 0.0, %v1745
      %v1747 = vpop.f32.mrf.mxu0
      %v1748 = vpop.f32.mrf.mxu0
      %v1749 = vpop.f32.mrf.mxu0
      %1750 = vdwg.mxu0
      %v1752 = vsel %vm1216, %v1653, 0
      %v1755 = vsel %vm1463, %v1657, 0
      %1757 = vmatprep.subr.bf16.mxu0 0
      %1758 = vmatpush1.bf16.msra.mxu0 0
      %1759 = vmatprep.subr.bf16.mxu0 0
      %1760 = vmatpush1.bf16.msra.mxu0 0
      %1761 = vmatprep.subr.bf16.mxu0 0
      %1762 = vmatpush1.bf16.msra.mxu0 0
      %1763 = vmatprep.subr.bf16.mxu0 0
      %1764 = vmatpush1.bf16.msra.mxu0 0
      %1765 = vmatprep.subr.bf16.mxu0 0
      %1766 = vmatpush1.bf16.msra.mxu0 0
      %1767 = vmatprep.subr.bf16.mxu0 0
      %1768 = vmatpush1.bf16.msra.mxu0 0
      %1769 = vmatprep.subr.bf16.mxu0 0
      %1770 = vmatpush1.bf16.msra.mxu0 0
      %1771 = vmatprep.subr.bf16.mxu0 0
      %1772 = vmatpush1.bf16.msra.mxu0 %v1755
      %1773 = vmatprep.subr.bf16.mxu0 0
      %1774 = vmatpush2.bf16.msra.mxu0 0
      %1775 = vmatprep.subr.bf16.mxu0 0
      %1776 = vmatpush2.bf16.msra.mxu0 0
      %1777 = vmatprep.subr.bf16.mxu0 0
      %1778 = vmatpush2.bf16.msra.mxu0 0
      %1779 = vmatprep.subr.bf16.mxu0 0
      %1780 = vmatpush2.bf16.msra.mxu0 0
      %1781 = vmatprep.subr.bf16.mxu0 0
      %1782 = vmatpush2.bf16.msra.mxu0 0
      %1783 = vmatprep.subr.bf16.mxu0 0
      %1784 = vmatpush2.bf16.msra.mxu0 0
      %1785 = vmatprep.subr.bf16.mxu0 0
      %1786 = vmatpush2.bf16.msra.mxu0 0
      %1787 = vmatprep.subr.bf16.mxu0 0
      %1788 = vmatpush2.bf16.msra.mxu0 0
      %1789 = vmatprep.mubr.bf16.mxu0 0
      %1790 = vmatmul.mubr.bf16.gmra.mxu0 %v1752
      %v1791 = vpop.f32.mrf.mxu0
      %v1792 = vadd.f32 0.0, %v1791
      %v1793 = vpop.f32.mrf.mxu0
      %v1794 = vpop.f32.mrf.mxu0
      %v1795 = vpop.f32.mrf.mxu0
      %1796 = vdwg.mxu0
      %v1798 = vsel %vm1216, %v1654, 0
      %v1801 = vsel %vm1463, %v1658, 0
      %1803 = vmatprep.subr.bf16.mxu0 0
      %1804 = vmatpush1.bf16.msra.mxu0 0
      %1805 = vmatprep.subr.bf16.mxu0 0
      %1806 = vmatpush1.bf16.msra.mxu0 0
      %1807 = vmatprep.subr.bf16.mxu0 0
      %1808 = vmatpush1.bf16.msra.mxu0 0
      %1809 = vmatprep.subr.bf16.mxu0 0
      %1810 = vmatpush1.bf16.msra.mxu0 0
      %1811 = vmatprep.subr.bf16.mxu0 0
      %1812 = vmatpush1.bf16.msra.mxu0 0
      %1813 = vmatprep.subr.bf16.mxu0 0
      %1814 = vmatpush1.bf16.msra.mxu0 0
      %1815 = vmatprep.subr.bf16.mxu0 0
      %1816 = vmatpush1.bf16.msra.mxu0 0
      %1817 = vmatprep.subr.bf16.mxu0 0
      %1818 = vmatpush1.bf16.msra.mxu0 %v1801
      %1819 = vmatprep.subr.bf16.mxu0 0
      %1820 = vmatpush2.bf16.msra.mxu0 0
      %1821 = vmatprep.subr.bf16.mxu0 0
      %1822 = vmatpush2.bf16.msra.mxu0 0
      %1823 = vmatprep.subr.bf16.mxu0 0
      %1824 = vmatpush2.bf16.msra.mxu0 0
      %1825 = vmatprep.subr.bf16.mxu0 0
      %1826 = vmatpush2.bf16.msra.mxu0 0
      %1827 = vmatprep.subr.bf16.mxu0 0
      %1828 = vmatpush2.bf16.msra.mxu0 0
      %1829 = vmatprep.subr.bf16.mxu0 0
      %1830 = vmatpush2.bf16.msra.mxu0 0
      %1831 = vmatprep.subr.bf16.mxu0 0
      %1832 = vmatpush2.bf16.msra.mxu0 0
      %1833 = vmatprep.subr.bf16.mxu0 0
      %1834 = vmatpush2.bf16.msra.mxu0 0
      %1835 = vmatprep.mubr.bf16.mxu0 0
      %1836 = vmatmul.mubr.bf16.gmra.mxu0 %v1798
      %v1837 = vpop.f32.mrf.mxu0
      %v1838 = vadd.f32 0.0, %v1837
      %v1839 = vpop.f32.mrf.mxu0
      %v1840 = vpop.f32.mrf.mxu0
      %v1841 = vpop.f32.mrf.mxu0
      %1842 = vdwg.mxu0
      %v1843 = vsel %vm1009, %v1700, 0.0
      %v1844 = vsel %vm1009, %v1746, 0.0
      %v1845 = vadd.f32 %v1843, %v1844
      %v1846 = vsel %vm1009, %v1792, 0.0
      %v1847 = vadd.f32 %v1845, %v1846
      %v1848 = vsel %vm1009, %v1838, 0.0
      %v1849 = vadd.f32 %v1847, %v1848
      %v1850 = vld [vmem:[%s908] sm:$0x1]
      %v1852 = vlaneseq
      %v1853 = vshrl.u32 %v1852, 7
      %v1854 = vsub.s32 0, %v1853
      %v1855 = vrot.slane %v1850, %v1854
      %v1857 = vadd.f32 %v1849, %v1855
      %v1858 = vadd.f32 %v951, %v1857
      %v1859 = vld [vmem:[%s911] sm:$0x1]
      %v1860 = vld [vmem:[%s914] sm:$0x1]
      %v1861 = vsel %vm1009, %v1858, 0.0
      %1862 = vadd.xlane.f32.xlu0 %v1861
      %v1863 = vpop.xlane.xlu0 %1862
      %v1864 = vrcp.pop 32.0
      %v1865 = vmul.f32 %v1863, %v1864
      %v1866 = vsub.f32 %v1858, %v1865
      %v1867 = vmul.f32 %v1866, %v1866
      %v1868 = vsel %vm1009, %v1867, 0.0
      %1869 = vadd.xlane.f32.xlu0 %v1868
      %v1870 = vpop.xlane.xlu0 %1869
      %v1871 = vmul.f32 %v1870, %v1864
      %v1872 = vadd.f32 %v1871, 1e-05
      %v1873 = vrsqrt.pop %v1872
      %v1874 = vmul.f32 %v1866, %v1873
      %v1876 = vlaneseq
      %v1877 = vshrl.u32 %v1876, 7
      %v1878 = vsub.s32 0, %v1877
      %v1879 = vrot.slane %v1859, %v1878
      %v1881 = vmul.f32 %v1874, %v1879
      %v1883 = vlaneseq
      %v1884 = vshrl.u32 %v1883, 7
      %v1885 = vsub.s32 0, %v1884
      %v1886 = vrot.slane %v1860, %v1885
      %v1888 = vadd.f32 %v1881, %v1886
      %v1889 = vpack.c.bf16 %v1888, %v1888
      %v1890 = vld [vmem:[%s925] sm:$0xf]
      %v1891 = vld [vmem:[%s925 + $0x4] sm:$0xf]
      %v1892 = vld [vmem:[%s925 + $0x8] sm:$0xf]
      %v1893 = vld [vmem:[%s925 + $0xc] sm:$0xf]
      %v1894 = vld [vmem:[%s928] sm:$0x1]
      %v1896 = vlaneseq
      %v1897 = vshrl.u32 %v1896, 7
      %v1898 = vsub.s32 0, %v1897
      %v1899 = vrot.slane %v1894, %v1898
      %v1905 = vunpack.c.l.b16 %v1890
      %v1906 = vunpack.c.l.b16 %v1891
      %v1907 = vunpack.c.l.b16 %v1892
      %v1908 = vunpack.c.l.b16 %v1893
      %v1909 = vpack.c.b16 %v1906, %v1905
      %v1910 = vpack.c.b16 %v1908, %v1907
      %v1914 = vsel %vm1009, %v1889, 0
      %1916 = vmatprep.subr.bf16.mxu0 0
      %1917 = vmatpush1.bf16.msra.mxu0 0
      %1918 = vmatprep.subr.bf16.mxu0 0
      %1919 = vmatpush1.bf16.msra.mxu0 0
      %1920 = vmatprep.subr.bf16.mxu0 0
      %1921 = vmatpush1.bf16.msra.mxu0 0
      %1922 = vmatprep.subr.bf16.mxu0 0
      %1923 = vmatpush1.bf16.msra.mxu0 0
      %1924 = vmatprep.subr.bf16.mxu0 0
      %1925 = vmatpush1.bf16.msra.mxu0 0
      %1926 = vmatprep.subr.bf16.mxu0 0
      %1927 = vmatpush1.bf16.msra.mxu0 0
      %1928 = vmatprep.subr.bf16.mxu0 0
      %1929 = vmatpush1.bf16.msra.mxu0 %v1910
      %1930 = vmatprep.subr.bf16.mxu0 0
      %1931 = vmatpush1.bf16.msra.mxu0 %v1909
      %1932 = vmatprep.subr.bf16.mxu0 0
      %1933 = vmatpush2.bf16.msra.mxu0 0
      %1934 = vmatprep.subr.bf16.mxu0 0
      %1935 = vmatpush2.bf16.msra.mxu0 0
      %1936 = vmatprep.subr.bf16.mxu0 0
      %1937 = vmatpush2.bf16.msra.mxu0 0
      %1938 = vmatprep.subr.bf16.mxu0 0
      %1939 = vmatpush2.bf16.msra.mxu0 0
      %1940 = vmatprep.subr.bf16.mxu0 0
      %1941 = vmatpush2.bf16.msra.mxu0 0
      %1942 = vmatprep.subr.bf16.mxu0 0
      %1943 = vmatpush2.bf16.msra.mxu0 0
      %1944 = vmatprep.subr.bf16.mxu0 0
      %1945 = vmatpush2.bf16.msra.mxu0 0
      %1946 = vmatprep.subr.bf16.mxu0 0
      %1947 = vmatpush2.bf16.msra.mxu0 0
      %1948 = vmatprep.mubr.bf16.mxu0 0
      %1949 = vmatmul.mubr.bf16.gmra.mxu0 %v1914
      %v1950 = vpop.f32.mrf.mxu0
      %v1951 = vadd.f32 %v1899, %v1950
      %v1952 = vpop.f32.mrf.mxu0
      %v1953 = vpop.f32.mrf.mxu0
      %v1954 = vpop.f32.mrf.mxu0
      %1955 = vdwg.mxu0
      %v1956 = vmul.f32 %v1951, 0.5
      %v1957 = vmul.f32 %v1951, 0.70710677
      %v1958 = verf.f32.pop %v1957
      %v1959 = vadd.f32 %v1958, 1.0
      %v1960 = vmul.f32 %v1956, %v1959
      %v1961 = vpack.c.bf16 %v1960, %v1960
      %v1962 = vld [vmem:[%s933] sm:$0xf]
      %v1963 = vld [vmem:[%s933 + $0x4] sm:$0xf]
      %v1964 = vld [vmem:[%s933 + $0x8] sm:$0xf]
      %v1965 = vld [vmem:[%s933 + $0xc] sm:$0xf]
      %v1966 = vld [vmem:[%s933 + $0x10] sm:$0xf]
      %v1967 = vld [vmem:[%s933 + $0x14] sm:$0xf]
      %v1968 = vld [vmem:[%s933 + $0x18] sm:$0xf]
      %v1969 = vld [vmem:[%s933 + $0x1c] sm:$0xf]
      %v1970 = vld [vmem:[%s936] sm:$0x1]
      %v1972 = vlaneseq
      %v1973 = vshrl.u32 %v1972, 7
      %v1974 = vsub.s32 0, %v1973
      %v1975 = vrot.slane %v1970, %v1974
      %v1985 = vunpack.c.l.b16 %v1962
      %v1986 = vunpack.c.l.b16 %v1963
      %v1987 = vunpack.c.l.b16 %v1964
      %v1988 = vunpack.c.l.b16 %v1965
      %v1989 = vunpack.c.l.b16 %v1966
      %v1990 = vunpack.c.l.b16 %v1967
      %v1991 = vunpack.c.l.b16 %v1968
      %v1992 = vunpack.c.l.b16 %v1969
      %v1993 = vpack.c.b16 %v1986, %v1985
      %v1994 = vpack.c.b16 %v1988, %v1987
      %v1995 = vpack.c.b16 %v1990, %v1989
      %v1996 = vpack.c.b16 %v1992, %v1991
      %vm2001 = vcmask 523264
      %v2003 = vsel %vm2001, %v1961, 0
      %2005 = vmatprep.subr.bf16.mxu0 0
      %2006 = vmatpush1.bf16.msra.mxu0 0
      %2007 = vmatprep.subr.bf16.mxu0 0
      %2008 = vmatpush1.bf16.msra.mxu0 0
      %2009 = vmatprep.subr.bf16.mxu0 0
      %2010 = vmatpush1.bf16.msra.mxu0 0
      %2011 = vmatprep.subr.bf16.mxu0 0
      %2012 = vmatpush1.bf16.msra.mxu0 0
      %2013 = vmatprep.subr.bf16.mxu0 0
      %2014 = vmatpush1.bf16.msra.mxu0 %v1996
      %2015 = vmatprep.subr.bf16.mxu0 0
      %2016 = vmatpush1.bf16.msra.mxu0 %v1995
      %2017 = vmatprep.subr.bf16.mxu0 0
      %2018 = vmatpush1.bf16.msra.mxu0 %v1994
      %2019 = vmatprep.subr.bf16.mxu0 0
      %2020 = vmatpush1.bf16.msra.mxu0 %v1993
      %2021 = vmatprep.subr.bf16.mxu0 0
      %2022 = vmatpush2.bf16.msra.mxu0 0
      %2023 = vmatprep.subr.bf16.mxu0 0
      %2024 = vmatpush2.bf16.msra.mxu0 0
      %2025 = vmatprep.subr.bf16.mxu0 0
      %2026 = vmatpush2.bf16.msra.mxu0 0
      %2027 = vmatprep.subr.bf16.mxu0 0
      %2028 = vmatpush2.bf16.msra.mxu0 0
      %2029 = vmatprep.subr.bf16.mxu0 0
      %2030 = vmatpush2.bf16.msra.mxu0 0
      %2031 = vmatprep.subr.bf16.mxu0 0
      %2032 = vmatpush2.bf16.msra.mxu0 0
      %2033 = vmatprep.subr.bf16.mxu0 0
      %2034 = vmatpush2.bf16.msra.mxu0 0
      %2035 = vmatprep.subr.bf16.mxu0 0
      %2036 = vmatpush2.bf16.msra.mxu0 0
      %2037 = vmatprep.mubr.bf16.mxu0 0
      %2038 = vmatmul.mubr.bf16.gmra.mxu0 %v2003
      %v2039 = vpop.f32.mrf.mxu0
      %v2040 = vadd.f32 %v1975, %v2039
      %v2041 = vpop.f32.mrf.mxu0
      %v2042 = vpop.f32.mrf.mxu0
      %v2043 = vpop.f32.mrf.mxu0
      %2044 = vdwg.mxu0
      %v2045 = vadd.f32 %v1888, %v2040
      %v2046 = vld [vmem:[%s917] sm:$0x1]
      %v2047 = vld [vmem:[%s920] sm:$0x1]
      %v2048 = vsel %vm1009, %v2045, 0.0
      %2049 = vadd.xlane.f32.xlu0 %v2048
      %v2050 = vpop.xlane.xlu0 %2049
      %v2051 = vmul.f32 %v2050, %v1864
      %v2052 = vsub.f32 %v2045, %v2051
      %v2053 = vmul.f32 %v2052, %v2052
      %v2054 = vsel %vm1009, %v2053, 0.0
      %2055 = vadd.xlane.f32.xlu0 %v2054
      %v2056 = vpop.xlane.xlu0 %2055
      %v2057 = vmul.f32 %v2056, %v1864
      %v2058 = vadd.f32 %v2057, 1e-05
      %v2059 = vrsqrt.pop %v2058
      %v2060 = vmul.f32 %v2052, %v2059
      %v2062 = vlaneseq
      %v2063 = vshrl.u32 %v2062, 7
      %v2064 = vsub.s32 0, %v2063
      %v2065 = vrot.slane %v2046, %v2064
      %v2067 = vmul.f32 %v2060, %v2065
      %v2069 = vlaneseq
      %v2070 = vshrl.u32 %v2069, 7
      %v2071 = vsub.s32 0, %v2070
      %v2072 = vrot.slane %v2047, %v2071
      %v2074 = vadd.f32 %v2067, %v2072
      %2075 = vst.msk [vmem:[#allocation2] sm:$0xff] %vm1009, %v2074
      %p2076 = scmp.eq.s32.totalorder %s42, 1
      // Predicated region
      $region121: #{tpu_custom_call.1} parent=115 // pred_check
        %p2077 = pneg %p2076
      $region122: #{tpu_custom_call.1} parent=115 // pred_check_branch
        %2079 = sbr.rel (%p2077) target = $region124
      $region123: #{tpu_custom_call.1} parent=115 // pred_region
        %v2080 = vld [vmem:[%s14] sm:$0x1]
        %v2081 = vld [vmem:[%s15] sm:$0x1]
        %vm2082 = vcmask 261127
        %v2083 = vsel %vm2082, %v2074, 0.0
        %2084 = vadd.xlane.f32.xlu0 %v2083
        %v2085 = vpop.xlane.xlu0 %2084
        %v2086 = vmul.f32 %v2085, %v1864
        %v2087 = vsub.f32 %v2074, %v2086
        %v2088 = vmul.f32 %v2087, %v2087
        %v2089 = vsel %vm2082, %v2088, 0.0
        %2090 = vadd.xlane.f32.xlu0 %v2089
        %v2091 = vpop.xlane.xlu0 %2090
        %v2092 = vmul.f32 %v2091, %v1864
        %v2093 = vadd.f32 %v2092, 1e-05
        %v2094 = vrsqrt.pop %v2093
        %v2095 = vmul.f32 %v2087, %v2094
        %v2097 = vlaneseq
        %v2098 = vshrl.u32 %v2097, 7
        %v2099 = vsub.s32 0, %v2098
        %v2100 = vrot.slane %v2080, %v2099
        %v2102 = vmul.f32 %v2095, %v2100
        %v2104 = vlaneseq
        %v2105 = vshrl.u32 %v2104, 7
        %v2106 = vsub.s32 0, %v2105
        %v2107 = vrot.slane %v2081, %v2106
        %v2109 = vadd.f32 %v2102, %v2107
        %v2110 = vpack.c.bf16 %v2109, %v2109
        %v2111 = vld [vmem:[%s16] sm:$0xf]
        %v2112 = vld [vmem:[%s16 + $0x4] sm:$0xf]
        %v2113 = vld [vmem:[%s16 + $0x8] sm:$0xf]
        %v2114 = vld [vmem:[%s16 + $0xc] sm:$0xf]
        %v2115 = vld [vmem:[%s17] sm:$0x1]
        %v2117 = vshrl.u32 %v2110, 16
        %v2119 = vrot.slane %v2117, 3
        %v2124 = vunpack.c.l.b16 %v2111
        %v2125 = vunpack.c.l.b16 %v2112
        %v2126 = vunpack.c.l.b16 %v2113
        %v2127 = vunpack.c.l.b16 %v2114
        %v2128 = vpack.c.b16 %v2125, %v2124
        %v2129 = vpack.c.b16 %v2127, %v2126
        %v2133 = vsel %vm1009, %v2119, 0
        %2135 = vmatprep.subr.bf16.mxu0 0
        %2136 = vmatpush1.bf16.msra.mxu0 0
        %2137 = vmatprep.subr.bf16.mxu0 0
        %2138 = vmatpush1.bf16.msra.mxu0 0
        %2139 = vmatprep.subr.bf16.mxu0 0
        %2140 = vmatpush1.bf16.msra.mxu0 0
        %2141 = vmatprep.subr.bf16.mxu0 0
        %2142 = vmatpush1.bf16.msra.mxu0 0
        %2143 = vmatprep.subr.bf16.mxu0 0
        %2144 = vmatpush1.bf16.msra.mxu0 0
        %2145 = vmatprep.subr.bf16.mxu0 0
        %2146 = vmatpush1.bf16.msra.mxu0 0
        %2147 = vmatprep.subr.bf16.mxu0 0
        %2148 = vmatpush1.bf16.msra.mxu0 %v2129
        %2149 = vmatprep.subr.bf16.mxu0 0
        %2150 = vmatpush1.bf16.msra.mxu0 %v2128
        %2151 = vmatprep.subr.bf16.mxu0 0
        %2152 = vmatpush2.bf16.msra.mxu0 0
        %2153 = vmatprep.subr.bf16.mxu0 0
        %2154 = vmatpush2.bf16.msra.mxu0 0
        %2155 = vmatprep.subr.bf16.mxu0 0
        %2156 = vmatpush2.bf16.msra.mxu0 0
        %2157 = vmatprep.subr.bf16.mxu0 0
        %2158 = vmatpush2.bf16.msra.mxu0 0
        %2159 = vmatprep.subr.bf16.mxu0 0
        %2160 = vmatpush2.bf16.msra.mxu0 0
        %2161 = vmatprep.subr.bf16.mxu0 0
        %2162 = vmatpush2.bf16.msra.mxu0 0
        %2163 = vmatprep.subr.bf16.mxu0 0
        %2164 = vmatpush2.bf16.msra.mxu0 0
        %2165 = vmatprep.subr.bf16.mxu0 0
        %2166 = vmatpush2.bf16.msra.mxu0 0
        %2167 = vmatprep.mubr.bf16.mxu0 0
        %2168 = vmatmul.mubr.bf16.gmra.mxu0 %v2133
        %v2169 = vpop.f32.mrf.mxu0
        %v2170 = vadd.f32 %v2115, %v2169
        %v2171 = vpop.f32.mrf.mxu0
        %v2172 = vpop.f32.mrf.mxu0
        %v2173 = vpop.f32.mrf.mxu0
        %2174 = vdwg.mxu0
        %v2175 = vmax.f32 %v2170, 0.0
        %v2176 = vpack.c.bf16 %v2175, %v2175
        %v2177 = vld [vmem:[%s18] sm:$0xf]
        %v2178 = vld [vmem:[%s18 + $0x4] sm:$0xf]
        %v2179 = vld [vmem:[%s18 + $0x8] sm:$0xf]
        %v2180 = vld [vmem:[%s18 + $0xc] sm:$0xf]
        %v2181 = vld [vmem:[%s18 + $0x10] sm:$0xf]
        %v2182 = vld [vmem:[%s18 + $0x14] sm:$0xf]
        %v2183 = vld [vmem:[%s18 + $0x18] sm:$0xf]
        %v2184 = vld [vmem:[%s18 + $0x1c] sm:$0xf]
        %v2185 = vld [vmem:[%s19] sm:$0x1]
        %v2194 = vunpack.c.l.b16 %v2177
        %v2195 = vunpack.c.l.b16 %v2178
        %v2196 = vunpack.c.l.b16 %v2179
        %v2197 = vunpack.c.l.b16 %v2180
        %v2198 = vunpack.c.l.b16 %v2181
        %v2199 = vunpack.c.l.b16 %v2182
        %v2200 = vunpack.c.l.b16 %v2183
        %v2201 = vunpack.c.l.b16 %v2184
        %v2202 = vpack.c.b16 %v2195, %v2194
        %v2203 = vpack.c.b16 %v2197, %v2196
        %v2204 = vpack.c.b16 %v2199, %v2198
        %v2205 = vpack.c.b16 %v2201, %v2200
        %v2211 = vsel %vm2001, %v2176, 0
        %2213 = vmatprep.subr.bf16.mxu0 0
        %2214 = vmatpush1.bf16.msra.mxu0 0
        %2215 = vmatprep.subr.bf16.mxu0 0
        %2216 = vmatpush1.bf16.msra.mxu0 0
        %2217 = vmatprep.subr.bf16.mxu0 0
        %2218 = vmatpush1.bf16.msra.mxu0 0
        %2219 = vmatprep.subr.bf16.mxu0 0
        %2220 = vmatpush1.bf16.msra.mxu0 0
        %2221 = vmatprep.subr.bf16.mxu0 0
        %2222 = vmatpush1.bf16.msra.mxu0 %v2205
        %2223 = vmatprep.subr.bf16.mxu0 0
        %2224 = vmatpush1.bf16.msra.mxu0 %v2204
        %2225 = vmatprep.subr.bf16.mxu0 0
        %2226 = vmatpush1.bf16.msra.mxu0 %v2203
        %2227 = vmatprep.subr.bf16.mxu0 0
        %2228 = vmatpush1.bf16.msra.mxu0 %v2202
        %2229 = vmatprep.subr.bf16.mxu0 0
        %2230 = vmatpush2.bf16.msra.mxu0 0
        %2231 = vmatprep.subr.bf16.mxu0 0
        %2232 = vmatpush2.bf16.msra.mxu0 0
        %2233 = vmatprep.subr.bf16.mxu0 0
        %2234 = vmatpush2.bf16.msra.mxu0 0
        %2235 = vmatprep.subr.bf16.mxu0 0
        %2236 = vmatpush2.bf16.msra.mxu0 0
        %2237 = vmatprep.subr.bf16.mxu0 0
        %2238 = vmatpush2.bf16.msra.mxu0 0
        %2239 = vmatprep.subr.bf16.mxu0 0
        %2240 = vmatpush2.bf16.msra.mxu0 0
        %2241 = vmatprep.subr.bf16.mxu0 0
        %2242 = vmatpush2.bf16.msra.mxu0 0
        %2243 = vmatprep.subr.bf16.mxu0 0
        %2244 = vmatpush2.bf16.msra.mxu0 0
        %2245 = vmatprep.mubr.bf16.mxu0 0
        %2246 = vmatmul.mubr.bf16.gmra.mxu0 %v2211
        %v2247 = vpop.f32.mrf.mxu0
        %v2248 = vadd.f32 %v2185, %v2247
        %v2249 = vpop.f32.mrf.mxu0
        %v2250 = vpop.f32.mrf.mxu0
        %v2251 = vpop.f32.mrf.mxu0
        %2252 = vdwg.mxu0
        %v2254 = vrot.slane %v2248, 1
        %v2256 = vadd.f32 %v2109, %v2254
        %v2257 = vld [vmem:[%s20] sm:$0x1]
        %v2258 = vld [vmem:[%s21] sm:$0x1]
        %v2259 = vsel %vm2082, %v2256, 0.0
        %2260 = vadd.xlane.f32.xlu0 %v2259
        %v2261 = vpop.xlane.xlu0 %2260
        %v2262 = vmul.f32 %v2261, %v1864
        %v2263 = vsub.f32 %v2256, %v2262
        %v2264 = vmul.f32 %v2263, %v2263
        %v2265 = vsel %vm2082, %v2264, 0.0
        %2266 = vadd.xlane.f32.xlu0 %v2265
        %v2267 = vpop.xlane.xlu0 %2266
        %v2268 = vmul.f32 %v2267, %v1864
        %v2269 = vadd.f32 %v2268, 1e-05
        %v2270 = vrsqrt.pop %v2269
        %v2271 = vmul.f32 %v2263, %v2270
        %v2273 = vlaneseq
        %v2274 = vshrl.u32 %v2273, 7
        %v2275 = vsub.s32 0, %v2274
        %v2276 = vrot.slane %v2257, %v2275
        %v2278 = vmul.f32 %v2271, %v2276
        %v2280 = vlaneseq
        %v2281 = vshrl.u32 %v2280, 7
        %v2282 = vsub.s32 0, %v2281
        %v2283 = vrot.slane %v2258, %v2282
        %v2285 = vadd.f32 %v2278, %v2283
        %v2286 = vpack.c.bf16 %v2285, %v2285
        %v2287 = vld [vmem:[%s22] sm:$0xf]
        %v2288 = vld [vmem:[%s22 + $0x4] sm:$0xf]
        %v2289 = vld [vmem:[%s22 + $0x8] sm:$0xf]
        %v2290 = vld [vmem:[%s22 + $0xc] sm:$0xf]
        %v2291 = vld [vmem:[#allocation3] sm:$0x1]
        %v2293 = vshrl.u32 %v2286, 16
        %v2295 = vrot.slane %v2293, 3
        %v2300 = vunpack.c.l.b16 %v2287
        %v2301 = vunpack.c.l.b16 %v2288
        %v2302 = vunpack.c.l.b16 %v2289
        %v2303 = vunpack.c.l.b16 %v2290
        %v2304 = vpack.c.b16 %v2301, %v2300
        %v2305 = vpack.c.b16 %v2303, %v2302
        %v2309 = vsel %vm1009, %v2295, 0
        %2311 = vmatprep.subr.bf16.mxu0 0
        %2312 = vmatpush1.bf16.msra.mxu0 0
        %2313 = vmatprep.subr.bf16.mxu0 0
        %2314 = vmatpush1.bf16.msra.mxu0 0
        %2315 = vmatprep.subr.bf16.mxu0 0
        %2316 = vmatpush1.bf16.msra.mxu0 0
        %2317 = vmatprep.subr.bf16.mxu0 0
        %2318 = vmatpush1.bf16.msra.mxu0 0
        %2319 = vmatprep.subr.bf16.mxu0 0
        %2320 = vmatpush1.bf16.msra.mxu0 0
        %2321 = vmatprep.subr.bf16.mxu0 0
        %2322 = vmatpush1.bf16.msra.mxu0 0
        %2323 = vmatprep.subr.bf16.mxu0 0
        %2324 = vmatpush1.bf16.msra.mxu0 %v2305
        %2325 = vmatprep.subr.bf16.mxu0 0
        %2326 = vmatpush1.bf16.msra.mxu0 %v2304
        %2327 = vmatprep.subr.bf16.mxu0 0
        %2328 = vmatpush2.bf16.msra.mxu0 0
        %2329 = vmatprep.subr.bf16.mxu0 0
        %2330 = vmatpush2.bf16.msra.mxu0 0
        %2331 = vmatprep.subr.bf16.mxu0 0
        %2332 = vmatpush2.bf16.msra.mxu0 0
        %2333 = vmatprep.subr.bf16.mxu0 0
        %2334 = vmatpush2.bf16.msra.mxu0 0
        %2335 = vmatprep.subr.bf16.mxu0 0
        %2336 = vmatpush2.bf16.msra.mxu0 0
        %2337 = vmatprep.subr.bf16.mxu0 0
        %2338 = vmatpush2.bf16.msra.mxu0 0
        %2339 = vmatprep.subr.bf16.mxu0 0
        %2340 = vmatpush2.bf16.msra.mxu0 0
        %2341 = vmatprep.subr.bf16.mxu0 0
        %2342 = vmatpush2.bf16.msra.mxu0 0
        %2343 = vmatprep.mubr.bf16.mxu0 0
        %2344 = vmatmul.mubr.bf16.gmra.mxu0 %v2309
        %v2345 = vpop.f32.mrf.mxu0
        %v2346 = vadd.f32 %v2291, %v2345
        %v2347 = vpop.f32.mrf.mxu0
        %v2348 = vpop.f32.mrf.mxu0
        %v2349 = vpop.f32.mrf.mxu0
        %2350 = vdwg.mxu0
        %v2351 = vsub.f32 0.0, %v2346
        %v2352 = vmul.f32 %v2351, 1.442695
        %v2353 = vpow.pop %v2352
        %v2354 = vadd.f32 %v2353, 1.0
        %v2355 = vrcp.pop %v2354
        %vm2356 = vcmask 0
        %2357 = vst.msk [vmem:[%s939] sm:$0x1] %vm2356, %v2355
      $region124: #{tpu_custom_call.1} parent=115 // pred_fallthru
        _
      %p2358 = scmp.lt.s32.totalorder %s41, 1
      %s2359 = scalar_select %p2358, %s41, 1
      %s2360 = scalar_lea.vmem %s24, %s2359
      // Predicated region
      $region125: #{tpu_custom_call.1} parent=115 // pred_check
        %p2361 = pneg %p636
      $region126: #{tpu_custom_call.1} parent=115 // pred_check_branch
        %2363 = sbr.rel (%p2361) target = $region128
      $region127: #{tpu_custom_call.1} parent=115 // pred_region
        _
      $region128: #{tpu_custom_call.1} parent=115 // pred_fallthru
        _
    $region116: #{tpu_custom_call.1} parent=5 // pred_fallthru
      _
    %p2364 = scmp.le.s32.totalorder 2, %s32
    // Predicated region
    $region129: #{tpu_custom_call.1} parent=5 // pred_check
      %p2365 = pneg %p2364
    $region130: #{tpu_custom_call.1} parent=5 // pred_check_branch
      %2367 = sbr.rel (%p2365) target = $region132
    $region131: #{tpu_custom_call.1} parent=5 // pred_region
      %s2368 = ssub.s32 %s32, 2
      // Predicated region
      $region133: #{tpu_custom_call.1} parent=131 // pred_check
        %p2369 = pneg %p642
      $region134: #{tpu_custom_call.1} parent=131 // pred_check_branch
        %2371 = sbr.rel (%p2369) target = $region136
      $region135: #{tpu_custom_call.1} parent=131 // pred_region
        %p2372 = scmp.lt.s32.totalorder %s43, 1
        %s2373 = scalar_select %p2372, %s43, 1
        %s2374 = scalar_lea.vmem %s24, %s2373
      $region136: #{tpu_custom_call.1} parent=131 // pred_fallthru
        _
    $region132: #{tpu_custom_call.1} parent=5 // pred_fallthru
      _
  $region6: #{tpu_custom_call.1} parent=0 // loop_footer
    %s36 = sadd.s32 1, %s32
  $region7: #{tpu_custom_call.1} parent=0 // loop_footer_branch
    %31 = sbr.rel target = $region3
  $region8: #{tpu_custom_call.1} parent=0 // loop_exit
    _

</llo_original>
